<compile_context>
chip_gen: v6e
topology: v6e:2x2x1
jax: 0.10.0
libtpu: 0.0.40
codegen_flags: <defaults>
</compile_context>

<pallas_src>
import numpy as np
import jax
import jax.numpy as jnp
from jax import lax
from jax.experimental import pallas as pl
from jax.experimental.pallas import tpu as pltpu


# Static sizes implied by the PyTorch module (28x28 input -> x.view(-1, 320)).
K = 5                    # conv kernel size
H_IN = 28                # input spatial size (single channel)
C1, C2 = 10, 20          # conv output channels
P1 = 12                  # pooled conv1 spatial size
P2 = 4                   # pooled conv2 spatial size
W1 = P1 * C1             # 120 = pooled1 row width, layout (q1, c1)
W2 = P2 * C2             # 80  = pooled2 row width, layout (q2, c2)
K1 = K * H_IN            # 140 = stage-1 contraction (kh folded in)
FC1_OUT, FC2_OUT = 50, 10
LANE = 128               # padded lane width for all intermediate activations


# ------------------------------ fused kernel --------------------------------

def _net_kernel(xs_ref, t1_ref, b1_ref, t2_ref, b2_ref,
                w1_ref, bf1_ref, w2_ref, bf2_ref, out_ref, p1_scr):
    B = out_ref.shape[0]                       # batch tile (static)

    # ---- stage 1: conv1 (kh folded into K, dw folded into N) + pool + relu ----
    # xs rows are ordered (dh, p, b); columns of z1 are (dw, q1*10+c1 padded to 128).
    z1 = jnp.dot(xs_ref[...], t1_ref[...],
                 preferred_element_type=jnp.float32)           # (24B, 256) f32
    h1 = jnp.maximum(z1[:, :LANE], z1[:, LANE:])               # horizontal pool (dw)
    v1 = jnp.maximum(h1[:P1 * B], h1[P1 * B:])                 # vertical pool (dh)
    p1_scr[...] = jnp.maximum(v1 + b1_ref[...], 0.0).astype(jnp.bfloat16)

    # ---- stage 2: conv2 -> (Dropout2d = identity) -> pool -> relu ----
    # TODO(synk): nn.Dropout2d / F.dropout are identity in the eval-mode forward.
    # kh stays a 5-step accumulation over contiguous (8B,128) row slabs of p1_scr.
    acc2 = jnp.dot(p1_scr[pl.ds(0, 8 * B), :], t2_ref[0],
                   preferred_element_type=jnp.float32)          # (8B, 256) f32
    for kh in range(1, K):
        acc2 += jnp.dot(p1_scr[pl.ds(kh * B, 8 * B), :], t2_ref[kh],
                        preferred_element_type=jnp.float32)
    h2 = jnp.maximum(acc2[:, :LANE], acc2[:, LANE:])            # (8B, 128), rows (r, b)

    # ---- head: flatten (baked into w1 layout) -> fc1 -> relu -> fc2 -> lsm ----
    hacc = None
    for p2 in range(P2):
        row = jnp.maximum(h2[2 * p2 * B:(2 * p2 + 1) * B],
                          h2[(2 * p2 + 1) * B:(2 * p2 + 2) * B])       # vertical pool
        row = jnp.maximum(row + b2_ref[...], 0.0).astype(jnp.bfloat16)  # (B, 128)
        part = jnp.dot(row, w1_ref[p2], preferred_element_type=jnp.float32)
        hacc = part if hacc is None else hacc + part
    h = jnp.maximum(hacc + bf1_ref[...], 0.0).astype(jnp.bfloat16)      # (B, 50)
    z = jnp.dot(h, w2_ref[...], preferred_element_type=jnp.float32) + bf2_ref[...]
    m = jnp.max(z, axis=1, keepdims=True)
    lse = jnp.log(jnp.sum(jnp.exp(z - m), axis=1, keepdims=True))
    out_ref[...] = z - m - lse                                          # (B, 10)


# --------------------------- host-side weight prep ---------------------------

def _round_up(n, m):
    return (n + m - 1) // m * m


def _conv1_band(w):
    """(10,1,5,5) OIHW -> (140, 256): rows kh*28+w_in, cols dw*128 + (q1*10+c1)."""
    kh = np.arange(K).reshape(K, 1, 1, 1, 1)
    wi = np.arange(H_IN).reshape(1, H_IN, 1, 1, 1)
    dw = np.arange(2).reshape(1, 1, 2, 1, 1)
    q = np.arange(P1).reshape(1, 1, 1, P1, 1)
    c = np.arange(C1).reshape(1, 1, 1, 1, C1)
    kw = wi - 2 * q - dw
    valid = (kw >= 0) & (kw < K)
    vals = w[c, 0, kh, np.clip(kw, 0, K - 1)]                  # (5, 28, 2, 12, 10)
    vals = jnp.where(jnp.asarray(valid), vals, 0.0).reshape(K, H_IN, 2, W1)
    t = jnp.zeros((K, H_IN, 2, LANE), w.dtype).at[..., :W1].set(vals)
    return t.reshape(K1, 2 * LANE)


def _conv2_band(w):
    """(20,10,5,5) -> (5, 128, 256): [kh, q1*10+c1 (pad 128), dw*128 + q2*20+c2]."""
    kh = np.arange(K).reshape(K, 1, 1, 1, 1, 1)
    q1 = np.arange(P1).reshape(1, P1, 1, 1, 1, 1)
    c1 = np.arange(C1).reshape(1, 1, C1, 1, 1, 1)
    dw = np.arange(2).reshape(1, 1, 1, 2, 1, 1)
    q2 = np.arange(P2).reshape(1, 1, 1, 1, P2, 1)
    c2 = np.arange(C2).reshape(1, 1, 1, 1, 1, C2)
    kw = q1 - 2 * q2 - dw
    valid = (kw >= 0) & (kw < K)
    vals = w[c2, c1, kh, np.clip(kw, 0, K - 1)]                # (5, 12, 10, 2, 4, 20)
    vals = jnp.where(jnp.asarray(valid), vals, 0.0).reshape(K, W1, 2, W2)
    t = jnp.zeros((K, LANE, 2, LANE), w.dtype).at[:, :W1, :, :W2].set(vals)
    return t.reshape(K, LANE, 2 * LANE)


def _fc1_packed(w):
    """(50, 320) -> (4, 128, 50): PyTorch NCHW flatten folded into the weight."""
    h = np.arange(P2).reshape(P2, 1, 1)
    q = np.arange(P2).reshape(1, P2, 1)
    c = np.arange(C2).reshape(1, 1, C2)
    idx = c * (P2 * P2) + h * P2 + q                           # torch flat index
    wp = jnp.transpose(w[:, idx], (1, 2, 3, 0)).reshape(P2, W2, FC1_OUT)
    return jnp.zeros((P2, LANE, FC1_OUT), w.dtype).at[:, :W2, :].set(wp)


def net_forward(x_nchw, params, block_b=128):
    N = x_nchw.shape[0]
    B = _round_up(min(block_b, _round_up(N, 16)), 16)          # sublane/bf16 friendly
    n_pad = _round_up(N, B)
    T = n_pad // B

    # ---- input prep: fold (dh, kh) into host-side im2row, rows ordered (t, dh, p, b)
    x = x_nchw[:, 0, :, :].astype(jnp.float32)
    if n_pad != N:
        x = jnp.concatenate([x, jnp.zeros((n_pad - N, H_IN, H_IN), x.dtype)], axis=0)
    dh = np.arange(2).reshape(2, 1, 1)
    p = np.arange(P1).reshape(1, P1, 1)
    kh = np.arange(K).reshape(1, 1, K)
    rows = 2 * p + dh + kh                                     # (2, 12, 5)
    xs = x[:, rows, :].reshape(n_pad, 2, P1, K1)               # (Npad, 2, 12, 140)
    xs = jnp.transpose(xs, (1, 2, 0, 3)).reshape(2, P1, T, B, K1)
    xs = jnp.transpose(xs, (2, 0, 1, 3, 4)).reshape(T * 24 * B, K1).astype(jnp.bfloat16)

    # ---- weights: pool offsets, kh fold, flatten order all baked in host-side ----
    t1 = _conv1_band(params["conv1_w"]).astype(jnp.bfloat16)            # (140, 256)
    t2 = _conv2_band(params["conv2_w"]).astype(jnp.bfloat16)            # (5, 128, 256)
    b1 = jnp.zeros((1, LANE), jnp.float32).at[0, :W1].set(
        jnp.tile(params["conv1_b"].astype(jnp.float32), P1))
    b2 = jnp.zeros((1, LANE), jnp.float32).at[0, :W2].set(
        jnp.tile(params["conv2_b"].astype(jnp.float32), P2))
    w1p = _fc1_packed(params["fc1_w"]).astype(jnp.bfloat16)             # (4, 128, 50)
    bf1 = params["fc1_b"].reshape(1, FC1_OUT).astype(jnp.float32)
    w2 = params["fc2_w"].T.astype(jnp.bfloat16)                         # (50, 10)
    bf2 = params["fc2_b"].reshape(1, FC2_OUT).astype(jnp.float32)

    flops = n_pad * 2 * (24 * K1 * 256 + K * 8 * LANE * 256
                         + P2 * LANE * FC1_OUT + FC1_OUT * FC2_OUT)
    bytes_accessed = int(xs.size * 2 + (t1.size + t2.size + w1p.size + w2.size) * 2
                         + (b1.size + b2.size + bf1.size + bf2.size) * 4
                         + n_pad * FC2_OUT * 4)

    out = pl.pallas_call(
        _net_kernel,
        grid=(T,),
        out_shape=jax.ShapeDtypeStruct((n_pad, FC2_OUT), jnp.float32),
        in_specs=[
            pl.BlockSpec((24 * B, K1), lambda t: (t, 0)),               # im2row input
            pl.BlockSpec((K1, 2 * LANE), lambda t: (0, 0)),             # conv1 banded w
            pl.BlockSpec((1, LANE), lambda t: (0, 0)),                  # conv1 bias
            pl.BlockSpec((K, LANE, 2 * LANE), lambda t: (0, 0, 0)),     # conv2 banded w
            pl.BlockSpec((1, LANE), lambda t: (0, 0)),                  # conv2 bias
            pl.BlockSpec((P2, LANE, FC1_OUT), lambda t: (0, 0, 0)),     # fc1 (permuted)
            pl.BlockSpec((1, FC1_OUT), lambda t: (0, 0)),               # fc1 bias
            pl.BlockSpec((FC1_OUT, FC2_OUT), lambda t: (0, 0)),         # fc2 weight
            pl.BlockSpec((1, FC2_OUT), lambda t: (0, 0)),               # fc2 bias
        ],
        out_specs=pl.BlockSpec((B, FC2_OUT), lambda t: (t, 0)),
        scratch_shapes=[pltpu.VMEM((P1 * B, LANE), jnp.bfloat16)],      # pooled1
        compiler_params=pltpu.CompilerParams(
            dimension_semantics=("parallel",),
            vmem_limit_bytes=48 * 1024 * 1024),
        cost_estimate=pl.CostEstimate(flops=flops, transcendentals=n_pad * 11,
                                      bytes_accessed=bytes_accessed),
    )(xs, t1, b1, t2, b2, w1p, bf1, w2, bf2)
    return out[:N]


# ------------------------------ reference / test -----------------------------

def init_params(key):
    ks = jax.random.split(key, 8)

    def u(k, shape, fan_in):
        bound = 1.0 / np.sqrt(fan_in)
        return jax.random.uniform(k, shape, jnp.float32, -bound, bound)

    return dict(
        conv1_w=u(ks[0], (10, 1, 5, 5), 25),
        conv1_b=u(ks[1], (10,), 25),
        conv2_w=u(ks[2], (20, 10, 5, 5), 250),
        conv2_b=u(ks[3], (20,), 250),
        fc1_w=u(ks[4], (50, 320), 320),
        fc1_b=u(ks[5], (50,), 320),
        fc2_w=u(ks[6], (10, 50), 50),
        fc2_b=u(ks[7], (10,), 50),
    )


def reference_forward(x, p):
    """Pure-JAX f32 reference mirroring the PyTorch forward (eval mode)."""
    y = lax.conv_general_dilated(x, p["conv1_w"], (1, 1), "VALID",
                                 dimension_numbers=("NCHW", "OIHW", "NCHW"))
    y = y + p["conv1_b"][None, :, None, None]
    y = lax.reduce_window(y, -jnp.inf, lax.max, (1, 1, 2, 2), (1, 1, 2, 2), "VALID")
    y = jnp.maximum(y, 0.0)
    y = lax.conv_general_dilated(y, p["conv2_w"], (1, 1), "VALID",
                                 dimension_numbers=("NCHW", "OIHW", "NCHW"))
    y = y + p["conv2_b"][None, :, None, None]
    y = lax.reduce_window(y, -jnp.inf, lax.max, (1, 1, 2, 2), (1, 1, 2, 2), "VALID")
    y = jnp.maximum(y, 0.0)
    y = y.reshape(y.shape[0], -1)
    y = jnp.maximum(y @ p["fc1_w"].T + p["fc1_b"], 0.0)
    y = y @ p["fc2_w"].T + p["fc2_b"]
    return jax.nn.log_softmax(y, axis=1)


if __name__ == "__main__":
    key = jax.random.PRNGKey(0)
    pk, xk = jax.random.split(key)
    params = init_params(pk)

    # Spatial size must be 28x28 so that `x.view(-1, 320)` is consistent.
    x = jax.random.normal(xk, (2, 1, 28, 28), jnp.float32)

    out = jax.block_until_ready(jax.jit(net_forward)(x, params))
    ref = jax.block_until_ready(jax.jit(reference_forward)(x, params))

    assert out.shape == (2, 10)
    np.testing.assert_allclose(np.asarray(out), np.asarray(ref), rtol=5e-2, atol=5e-2)
    print("KERNEL_OK")
</pallas_src>

<mosaic_0001>
module attributes {stable_mosaic.version = 11 : i64} {
  func.func @_net_kernel(%arg0: i32, %arg1: memref<384x140xbf16, #tpu.memory_space<vmem>>, %arg2: memref<140x256xbf16, #tpu.memory_space<vmem>>, %arg3: memref<1x128xf32, #tpu.memory_space<vmem>>, %arg4: memref<5x128x256xbf16, #tpu.memory_space<vmem>>, %arg5: memref<1x128xf32, #tpu.memory_space<vmem>>, %arg6: memref<4x128x50xbf16, #tpu.memory_space<vmem>>, %arg7: memref<1x50xf32, #tpu.memory_space<vmem>>, %arg8: memref<50x10xbf16, #tpu.memory_space<vmem>>, %arg9: memref<1x10xf32, #tpu.memory_space<vmem>>, %arg10: memref<16x10xf32, #tpu.memory_space<vmem>>, %arg11: memref<192x128xbf16, #tpu.memory_space<vmem>>) attributes {dimension_semantics = [#tpu.dimension_semantics<parallel>], iteration_bounds = array<i64: 1>, scalar_prefetch = 0 : i64, scratch_operands = 1 : i64, tpu.core_type = #tpu.core_type<tc>, window_params = [{transform_indices = @transform_0, window_bounds = array<i64: 384, 140>}, {pipeline_mode = #tpu.pipeline_mode<synchronous>, transform_indices = @transform_1, window_bounds = array<i64: 140, 256>}, {pipeline_mode = #tpu.pipeline_mode<synchronous>, transform_indices = @transform_2, window_bounds = array<i64: 1, 128>}, {pipeline_mode = #tpu.pipeline_mode<synchronous>, transform_indices = @transform_3, window_bounds = array<i64: 5, 128, 256>}, {pipeline_mode = #tpu.pipeline_mode<synchronous>, transform_indices = @transform_4, window_bounds = array<i64: 1, 128>}, {pipeline_mode = #tpu.pipeline_mode<synchronous>, transform_indices = @transform_5, window_bounds = array<i64: 4, 128, 50>}, {pipeline_mode = #tpu.pipeline_mode<synchronous>, transform_indices = @transform_6, window_bounds = array<i64: 1, 50>}, {pipeline_mode = #tpu.pipeline_mode<synchronous>, transform_indices = @transform_7, window_bounds = array<i64: 50, 10>}, {pipeline_mode = #tpu.pipeline_mode<synchronous>, transform_indices = @transform_8, window_bounds = array<i64: 1, 10>}, {transform_indices = @transform_9, window_bounds = array<i64: 16, 10>}]} {
    %c0 = arith.constant 0 : index
    %c0_0 = arith.constant 0 : index
    %0 = vector.load %arg1[%c0, %c0_0] : memref<384x140xbf16, #tpu.memory_space<vmem>>, vector<384x140xbf16>
    %c0_1 = arith.constant 0 : index
    %c0_2 = arith.constant 0 : index
    %1 = vector.load %arg2[%c0_1, %c0_2] : memref<140x256xbf16, #tpu.memory_space<vmem>>, vector<140x256xbf16>
    %cst = arith.constant dense<0.000000e+00> : vector<384x256xf32>
    %2 = tpu.matmul %0, %1, %cst {dimension_numbers = #tpu.dot_dimension_numbers<[1], [0], [0], [1], [0, 0, 1, 1], [], []>} : vector<384x140xbf16>, vector<140x256xbf16>, vector<384x256xf32> -> vector<384x256xf32>
    %3 = vector.extract_strided_slice %2 {offsets = [0, 0], sizes = [384, 128], strides = [1, 1]} : vector<384x256xf32> to vector<384x128xf32>
    %4 = vector.extract_strided_slice %2 {offsets = [0, 128], sizes = [384, 128], strides = [1, 1]} : vector<384x256xf32> to vector<384x128xf32>
    %5 = arith.maximumf %3, %4 : vector<384x128xf32>
    %6 = vector.extract_strided_slice %5 {offsets = [0, 0], sizes = [192, 128], strides = [1, 1]} : vector<384x128xf32> to vector<192x128xf32>
    %7 = vector.extract_strided_slice %5 {offsets = [192, 0], sizes = [192, 128], strides = [1, 1]} : vector<384x128xf32> to vector<192x128xf32>
    %8 = arith.maximumf %6, %7 : vector<192x128xf32>
    %c0_3 = arith.constant 0 : index
    %c0_4 = arith.constant 0 : index
    %9 = vector.load %arg3[%c0_3, %c0_4] : memref<1x128xf32, #tpu.memory_space<vmem>>, vector<1x128xf32>
    %10 = vector.broadcast %9 : vector<1x128xf32> to vector<192x128xf32>
    %11 = arith.addf %8, %10 : vector<192x128xf32>
    %cst_5 = arith.constant 0.000000e+00 : f32
    %12 = vector.broadcast %cst_5 : f32 to vector<192x128xf32>
    %13 = arith.maximumf %11, %12 : vector<192x128xf32>
    %14 = arith.truncf %13 : vector<192x128xf32> to vector<192x128xbf16>
    %c0_6 = arith.constant 0 : index
    %c0_7 = arith.constant 0 : index
    %15 = vector.load %arg11[%c0_6, %c0_7] : memref<192x128xbf16, #tpu.memory_space<vmem>>, vector<192x128xbf16>
    tpu.vector_store %arg11[%c0_6, %c0_7], %14 {strides = array<i32>} : memref<192x128xbf16, #tpu.memory_space<vmem>>, vector<192x128xbf16>,
    %c0_8 = arith.constant 0 : index
    %c0_9 = arith.constant 0 : index
    %16 = vector.load %arg11[%c0_8, %c0_9] : memref<192x128xbf16, #tpu.memory_space<vmem>>, vector<128x128xbf16>
    %c0_10 = arith.constant 0 : index
    %c0_11 = arith.constant 0 : index
    %c0_12 = arith.constant 0 : index
    %17 = vector.load %arg4[%c0_10, %c0_11, %c0_12] : memref<5x128x256xbf16, #tpu.memory_space<vmem>>, vector<1x128x256xbf16>
    %18 = vector.shape_cast %17 : vector<1x128x256xbf16> to vector<128x256xbf16>
    %cst_13 = arith.constant dense<0.000000e+00> : vector<128x256xf32>
    %19 = tpu.matmul %16, %18, %cst_13 {dimension_numbers = #tpu.dot_dimension_numbers<[1], [0], [0], [1], [0, 0, 1, 1], [], []>} : vector<128x128xbf16>, vector<128x256xbf16>, vector<128x256xf32> -> vector<128x256xf32>
    %c16 = arith.constant 16 : index
    %c0_14 = arith.constant 0 : index
    %20 = vector.load %arg11[%c16, %c0_14] : memref<192x128xbf16, #tpu.memory_space<vmem>>, vector<128x128xbf16>
    %c1 = arith.constant 1 : index
    %c0_15 = arith.constant 0 : index
    %c0_16 = arith.constant 0 : index
    %21 = vector.load %arg4[%c1, %c0_15, %c0_16] : memref<5x128x256xbf16, #tpu.memory_space<vmem>>, vector<1x128x256xbf16>
    %22 = vector.shape_cast %21 : vector<1x128x256xbf16> to vector<128x256xbf16>
    %cst_17 = arith.constant dense<0.000000e+00> : vector<128x256xf32>
    %23 = tpu.matmul %20, %22, %cst_17 {dimension_numbers = #tpu.dot_dimension_numbers<[1], [0], [0], [1], [0, 0, 1, 1], [], []>} : vector<128x128xbf16>, vector<128x256xbf16>, vector<128x256xf32> -> vector<128x256xf32>
    %24 = arith.addf %19, %23 : vector<128x256xf32>
    %c32 = arith.constant 32 : index
    %c0_18 = arith.constant 0 : index
    %25 = vector.load %arg11[%c32, %c0_18] : memref<192x128xbf16, #tpu.memory_space<vmem>>, vector<128x128xbf16>
    %c2 = arith.constant 2 : index
    %c0_19 = arith.constant 0 : index
    %c0_20 = arith.constant 0 : index
    %26 = vector.load %arg4[%c2, %c0_19, %c0_20] : memref<5x128x256xbf16, #tpu.memory_space<vmem>>, vector<1x128x256xbf16>
    %27 = vector.shape_cast %26 : vector<1x128x256xbf16> to vector<128x256xbf16>
    %cst_21 = arith.constant dense<0.000000e+00> : vector<128x256xf32>
    %28 = tpu.matmul %25, %27, %cst_21 {dimension_numbers = #tpu.dot_dimension_numbers<[1], [0], [0], [1], [0, 0, 1, 1], [], []>} : vector<128x128xbf16>, vector<128x256xbf16>, vector<128x256xf32> -> vector<128x256xf32>
    %29 = arith.addf %24, %28 : vector<128x256xf32>
    %c48 = arith.constant 48 : index
    %c0_22 = arith.constant 0 : index
    %30 = vector.load %arg11[%c48, %c0_22] : memref<192x128xbf16, #tpu.memory_space<vmem>>, vector<128x128xbf16>
    %c3 = arith.constant 3 : index
    %c0_23 = arith.constant 0 : index
    %c0_24 = arith.constant 0 : index
    %31 = vector.load %arg4[%c3, %c0_23, %c0_24] : memref<5x128x256xbf16, #tpu.memory_space<vmem>>, vector<1x128x256xbf16>
    %32 = vector.shape_cast %31 : vector<1x128x256xbf16> to vector<128x256xbf16>
    %cst_25 = arith.constant dense<0.000000e+00> : vector<128x256xf32>
    %33 = tpu.matmul %30, %32, %cst_25 {dimension_numbers = #tpu.dot_dimension_numbers<[1], [0], [0], [1], [0, 0, 1, 1], [], []>} : vector<128x128xbf16>, vector<128x256xbf16>, vector<128x256xf32> -> vector<128x256xf32>
    %34 = arith.addf %29, %33 : vector<128x256xf32>
    %c64 = arith.constant 64 : index
    %c0_26 = arith.constant 0 : index
    %35 = vector.load %arg11[%c64, %c0_26] : memref<192x128xbf16, #tpu.memory_space<vmem>>, vector<128x128xbf16>
    %c4 = arith.constant 4 : index
    %c0_27 = arith.constant 0 : index
    %c0_28 = arith.constant 0 : index
    %36 = vector.load %arg4[%c4, %c0_27, %c0_28] : memref<5x128x256xbf16, #tpu.memory_space<vmem>>, vector<1x128x256xbf16>
    %37 = vector.shape_cast %36 : vector<1x128x256xbf16> to vector<128x256xbf16>
    %cst_29 = arith.constant dense<0.000000e+00> : vector<128x256xf32>
    %38 = tpu.matmul %35, %37, %cst_29 {dimension_numbers = #tpu.dot_dimension_numbers<[1], [0], [0], [1], [0, 0, 1, 1], [], []>} : vector<128x128xbf16>, vector<128x256xbf16>, vector<128x256xf32> -> vector<128x256xf32>
    %39 = arith.addf %34, %38 : vector<128x256xf32>
    %40 = vector.extract_strided_slice %39 {offsets = [0, 0], sizes = [128, 128], strides = [1, 1]} : vector<128x256xf32> to vector<128x128xf32>
    %41 = vector.extract_strided_slice %39 {offsets = [0, 128], sizes = [128, 128], strides = [1, 1]} : vector<128x256xf32> to vector<128x128xf32>
    %42 = arith.maximumf %40, %41 : vector<128x128xf32>
    %43 = vector.extract_strided_slice %42 {offsets = [0, 0], sizes = [16, 128], strides = [1, 1]} : vector<128x128xf32> to vector<16x128xf32>
    %44 = vector.extract_strided_slice %42 {offsets = [16, 0], sizes = [16, 128], strides = [1, 1]} : vector<128x128xf32> to vector<16x128xf32>
    %45 = arith.maximumf %43, %44 : vector<16x128xf32>
    %c0_30 = arith.constant 0 : index
    %c0_31 = arith.constant 0 : index
    %46 = vector.load %arg5[%c0_30, %c0_31] : memref<1x128xf32, #tpu.memory_space<vmem>>, vector<1x128xf32>
    %47 = vector.broadcast %46 : vector<1x128xf32> to vector<16x128xf32>
    %48 = arith.addf %45, %47 : vector<16x128xf32>
    %cst_32 = arith.constant 0.000000e+00 : f32
    %49 = vector.broadcast %cst_32 : f32 to vector<16x128xf32>
    %50 = arith.maximumf %48, %49 : vector<16x128xf32>
    %51 = arith.truncf %50 : vector<16x128xf32> to vector<16x128xbf16>
    %c0_33 = arith.constant 0 : index
    %c0_34 = arith.constant 0 : index
    %c0_35 = arith.constant 0 : index
    %52 = vector.load %arg6[%c0_33, %c0_34, %c0_35] : memref<4x128x50xbf16, #tpu.memory_space<vmem>>, vector<1x128x50xbf16>
    %53 = vector.shape_cast %52 : vector<1x128x50xbf16> to vector<128x50xbf16>
    %cst_36 = arith.constant dense<0.000000e+00> : vector<16x50xf32>
    %54 = tpu.matmul %51, %53, %cst_36 {dimension_numbers = #tpu.dot_dimension_numbers<[1], [0], [0], [1], [0, 0, 1, 1], [], []>} : vector<16x128xbf16>, vector<128x50xbf16>, vector<16x50xf32> -> vector<16x50xf32>
    %55 = vector.extract_strided_slice %42 {offsets = [32, 0], sizes = [16, 128], strides = [1, 1]} : vector<128x128xf32> to vector<16x128xf32>
    %56 = vector.extract_strided_slice %42 {offsets = [48, 0], sizes = [16, 128], strides = [1, 1]} : vector<128x128xf32> to vector<16x128xf32>
    %57 = arith.maximumf %55, %56 : vector<16x128xf32>
    %c0_37 = arith.constant 0 : index
    %c0_38 = arith.constant 0 : index
    %58 = vector.load %arg5[%c0_37, %c0_38] : memref<1x128xf32, #tpu.memory_space<vmem>>, vector<1x128xf32>
    %59 = vector.broadcast %58 : vector<1x128xf32> to vector<16x128xf32>
    %60 = arith.addf %57, %59 : vector<16x128xf32>
    %cst_39 = arith.constant 0.000000e+00 : f32
    %61 = vector.broadcast %cst_39 : f32 to vector<16x128xf32>
    %62 = arith.maximumf %60, %61 : vector<16x128xf32>
    %63 = arith.truncf %62 : vector<16x128xf32> to vector<16x128xbf16>
    %c1_40 = arith.constant 1 : index
    %c0_41 = arith.constant 0 : index
    %c0_42 = arith.constant 0 : index
    %64 = vector.load %arg6[%c1_40, %c0_41, %c0_42] : memref<4x128x50xbf16, #tpu.memory_space<vmem>>, vector<1x128x50xbf16>
    %65 = vector.shape_cast %64 : vector<1x128x50xbf16> to vector<128x50xbf16>
    %cst_43 = arith.constant dense<0.000000e+00> : vector<16x50xf32>
    %66 = tpu.matmul %63, %65, %cst_43 {dimension_numbers = #tpu.dot_dimension_numbers<[1], [0], [0], [1], [0, 0, 1, 1], [], []>} : vector<16x128xbf16>, vector<128x50xbf16>, vector<16x50xf32> -> vector<16x50xf32>
    %67 = arith.addf %54, %66 : vector<16x50xf32>
    %68 = vector.extract_strided_slice %42 {offsets = [64, 0], sizes = [16, 128], strides = [1, 1]} : vector<128x128xf32> to vector<16x128xf32>
    %69 = vector.extract_strided_slice %42 {offsets = [80, 0], sizes = [16, 128], strides = [1, 1]} : vector<128x128xf32> to vector<16x128xf32>
    %70 = arith.maximumf %68, %69 : vector<16x128xf32>
    %c0_44 = arith.constant 0 : index
    %c0_45 = arith.constant 0 : index
    %71 = vector.load %arg5[%c0_44, %c0_45] : memref<1x128xf32, #tpu.memory_space<vmem>>, vector<1x128xf32>
    %72 = vector.broadcast %71 : vector<1x128xf32> to vector<16x128xf32>
    %73 = arith.addf %70, %72 : vector<16x128xf32>
    %cst_46 = arith.constant 0.000000e+00 : f32
    %74 = vector.broadcast %cst_46 : f32 to vector<16x128xf32>
    %75 = arith.maximumf %73, %74 : vector<16x128xf32>
    %76 = arith.truncf %75 : vector<16x128xf32> to vector<16x128xbf16>
    %c2_47 = arith.constant 2 : index
    %c0_48 = arith.constant 0 : index
    %c0_49 = arith.constant 0 : index
    %77 = vector.load %arg6[%c2_47, %c0_48, %c0_49] : memref<4x128x50xbf16, #tpu.memory_space<vmem>>, vector<1x128x50xbf16>
    %78 = vector.shape_cast %77 : vector<1x128x50xbf16> to vector<128x50xbf16>
    %cst_50 = arith.constant dense<0.000000e+00> : vector<16x50xf32>
    %79 = tpu.matmul %76, %78, %cst_50 {dimension_numbers = #tpu.dot_dimension_numbers<[1], [0], [0], [1], [0, 0, 1, 1], [], []>} : vector<16x128xbf16>, vector<128x50xbf16>, vector<16x50xf32> -> vector<16x50xf32>
    %80 = arith.addf %67, %79 : vector<16x50xf32>
    %81 = vector.extract_strided_slice %42 {offsets = [96, 0], sizes = [16, 128], strides = [1, 1]} : vector<128x128xf32> to vector<16x128xf32>
    %82 = vector.extract_strided_slice %42 {offsets = [112, 0], sizes = [16, 128], strides = [1, 1]} : vector<128x128xf32> to vector<16x128xf32>
    %83 = arith.maximumf %81, %82 : vector<16x128xf32>
    %c0_51 = arith.constant 0 : index
    %c0_52 = arith.constant 0 : index
    %84 = vector.load %arg5[%c0_51, %c0_52] : memref<1x128xf32, #tpu.memory_space<vmem>>, vector<1x128xf32>
    %85 = vector.broadcast %84 : vector<1x128xf32> to vector<16x128xf32>
    %86 = arith.addf %83, %85 : vector<16x128xf32>
    %cst_53 = arith.constant 0.000000e+00 : f32
    %87 = vector.broadcast %cst_53 : f32 to vector<16x128xf32>
    %88 = arith.maximumf %86, %87 : vector<16x128xf32>
    %89 = arith.truncf %88 : vector<16x128xf32> to vector<16x128xbf16>
    %c3_54 = arith.constant 3 : index
    %c0_55 = arith.constant 0 : index
    %c0_56 = arith.constant 0 : index
    %90 = vector.load %arg6[%c3_54, %c0_55, %c0_56] : memref<4x128x50xbf16, #tpu.memory_space<vmem>>, vector<1x128x50xbf16>
    %91 = vector.shape_cast %90 : vector<1x128x50xbf16> to vector<128x50xbf16>
    %cst_57 = arith.constant dense<0.000000e+00> : vector<16x50xf32>
    %92 = tpu.matmul %89, %91, %cst_57 {dimension_numbers = #tpu.dot_dimension_numbers<[1], [0], [0], [1], [0, 0, 1, 1], [], []>} : vector<16x128xbf16>, vector<128x50xbf16>, vector<16x50xf32> -> vector<16x50xf32>
    %93 = arith.addf %80, %92 : vector<16x50xf32>
    %c0_58 = arith.constant 0 : index
    %c0_59 = arith.constant 0 : index
    %94 = vector.load %arg7[%c0_58, %c0_59] : memref<1x50xf32, #tpu.memory_space<vmem>>, vector<1x50xf32>
    %95 = vector.broadcast %94 : vector<1x50xf32> to vector<16x50xf32>
    %96 = arith.addf %93, %95 : vector<16x50xf32>
    %cst_60 = arith.constant 0.000000e+00 : f32
    %97 = vector.broadcast %cst_60 : f32 to vector<16x50xf32>
    %98 = arith.maximumf %96, %97 : vector<16x50xf32>
    %99 = arith.truncf %98 : vector<16x50xf32> to vector<16x50xbf16>
    %c0_61 = arith.constant 0 : index
    %c0_62 = arith.constant 0 : index
    %100 = vector.load %arg8[%c0_61, %c0_62] : memref<50x10xbf16, #tpu.memory_space<vmem>>, vector<50x10xbf16>
    %cst_63 = arith.constant dense<0.000000e+00> : vector<16x10xf32>
    %101 = tpu.matmul %99, %100, %cst_63 {dimension_numbers = #tpu.dot_dimension_numbers<[1], [0], [0], [1], [0, 0, 1, 1], [], []>} : vector<16x50xbf16>, vector<50x10xbf16>, vector<16x10xf32> -> vector<16x10xf32>
    %c0_64 = arith.constant 0 : index
    %c0_65 = arith.constant 0 : index
    %102 = vector.load %arg9[%c0_64, %c0_65] : memref<1x10xf32, #tpu.memory_space<vmem>>, vector<1x10xf32>
    %103 = vector.broadcast %102 : vector<1x10xf32> to vector<16x10xf32>
    %104 = arith.addf %101, %103 : vector<16x10xf32>
    %cst_66 = arith.constant dense<0xFF800000> : vector<16xf32>
    %105 = vector.multi_reduction <maximumf>, %104, %cst_66 [1] : vector<16x10xf32> to vector<16xf32>
    %106 = vector.shape_cast %105 : vector<16xf32> to vector<16x1xf32>
    %107 = vector.broadcast %106 : vector<16x1xf32> to vector<16x10xf32>
    %108 = arith.subf %104, %107 : vector<16x10xf32>
    %109 = math.exp %108 : vector<16x10xf32>
    %cst_67 = arith.constant dense<0.000000e+00> : vector<16xf32>
    %110 = vector.multi_reduction <add>, %109, %cst_67 [1] : vector<16x10xf32> to vector<16xf32>
    %111 = vector.shape_cast %110 : vector<16xf32> to vector<16x1xf32>
    %112 = math.log %111 : vector<16x1xf32>
    %113 = vector.broadcast %106 : vector<16x1xf32> to vector<16x10xf32>
    %114 = arith.subf %104, %113 : vector<16x10xf32>
    %115 = vector.broadcast %112 : vector<16x1xf32> to vector<16x10xf32>
    %116 = arith.subf %114, %115 : vector<16x10xf32>
    %c0_68 = arith.constant 0 : index
    %c0_69 = arith.constant 0 : index
    %117 = vector.load %arg10[%c0_68, %c0_69] : memref<16x10xf32, #tpu.memory_space<vmem>>, vector<16x10xf32>
    tpu.vector_store %arg10[%c0_68, %c0_69], %116 {strides = array<i32>} : memref<16x10xf32, #tpu.memory_space<vmem>>, vector<16x10xf32>,
    return
  }
  func.func @transform_0(%arg0: i32) -> (i32, i32) {
    %c0_i32 = arith.constant 0 : i32
    %c0_i32_0 = arith.constant 0 : i32
    return %arg0, %c0_i32 : i32, i32
  }
  func.func @transform_1(%arg0: i32) -> (i32, i32) {
    %c0_i32 = arith.constant 0 : i32
    %c0_i32_0 = arith.constant 0 : i32
    %c0_i32_1 = arith.constant 0 : i32
    return %c0_i32, %c0_i32_0 : i32, i32
  }
  func.func @transform_2(%arg0: i32) -> (i32, i32) {
    %c0_i32 = arith.constant 0 : i32
    %c0_i32_0 = arith.constant 0 : i32
    %c0_i32_1 = arith.constant 0 : i32
    return %c0_i32, %c0_i32_0 : i32, i32
  }
  func.func @transform_3(%arg0: i32) -> (i32, i32, i32) {
    %c0_i32 = arith.constant 0 : i32
    %c0_i32_0 = arith.constant 0 : i32
    %c0_i32_1 = arith.constant 0 : i32
    %c0_i32_2 = arith.constant 0 : i32
    return %c0_i32, %c0_i32_0, %c0_i32_1 : i32, i32, i32
  }
  func.func @transform_4(%arg0: i32) -> (i32, i32) {
    %c0_i32 = arith.constant 0 : i32
    %c0_i32_0 = arith.constant 0 : i32
    %c0_i32_1 = arith.constant 0 : i32
    return %c0_i32, %c0_i32_0 : i32, i32
  }
  func.func @transform_5(%arg0: i32) -> (i32, i32, i32) {
    %c0_i32 = arith.constant 0 : i32
    %c0_i32_0 = arith.constant 0 : i32
    %c0_i32_1 = arith.constant 0 : i32
    %c0_i32_2 = arith.constant 0 : i32
    return %c0_i32, %c0_i32_0, %c0_i32_1 : i32, i32, i32
  }
  func.func @transform_6(%arg0: i32) -> (i32, i32) {
    %c0_i32 = arith.constant 0 : i32
    %c0_i32_0 = arith.constant 0 : i32
    %c0_i32_1 = arith.constant 0 : i32
    return %c0_i32, %c0_i32_0 : i32, i32
  }
  func.func @transform_7(%arg0: i32) -> (i32, i32) {
    %c0_i32 = arith.constant 0 : i32
    %c0_i32_0 = arith.constant 0 : i32
    %c0_i32_1 = arith.constant 0 : i32
    return %c0_i32, %c0_i32_0 : i32, i32
  }
  func.func @transform_8(%arg0: i32) -> (i32, i32) {
    %c0_i32 = arith.constant 0 : i32
    %c0_i32_0 = arith.constant 0 : i32
    %c0_i32_1 = arith.constant 0 : i32
    return %c0_i32, %c0_i32_0 : i32, i32
  }
  func.func @transform_9(%arg0: i32) -> (i32, i32) {
    %c0_i32 = arith.constant 0 : i32
    %c0_i32_0 = arith.constant 0 : i32
    return %arg0, %c0_i32 : i32, i32
  }
}

</mosaic_0001>

<llo_original>
// kernel: net_forward.1
$region0: #{net_forward.1}
  #allocation0 [shape = 'u32[]', space=smem, size = 0x4, offset = 0x4, fixed_abs, tag = 'smem constant byte address 0x4 - core index']
  #allocation1 [shape = 'u32[144,128]{1,0:T(1,128)}', space=vmem, size = 0x12000, scoped, tag = 'internal scratch']
  #allocation2 [shape = 'bf16[192,128]{1,0:T(8,128)(2,1)}', space=vmem, size = 0xc000, scoped, tag = 'scratch operand']
  %s0 = inlined_call_operand.vmem [shape: bf16[384,140], index: 0, kind: input, shape index: {}]
  %s1 = inlined_call_operand.vmem [shape: bf16[140,256], index: 1, kind: input, shape index: {}]
  %s2 = inlined_call_operand.vmem [shape: f32[1,128], index: 2, kind: input, shape index: {}]
  %s3 = inlined_call_operand.vmem [shape: bf16[5,128,256], index: 3, kind: input, shape index: {}]
  %s4 = inlined_call_operand.vmem [shape: f32[1,128], index: 4, kind: input, shape index: {}]
  %s5 = inlined_call_operand.vmem [shape: bf16[4,128,50], index: 5, kind: input, shape index: {}]
  %s6 = inlined_call_operand.vmem [shape: f32[1,50], index: 6, kind: input, shape index: {}]
  %s7 = inlined_call_operand.vmem [shape: bf16[50,10], index: 7, kind: input, shape index: {}]
  %s8 = inlined_call_operand.vmem [shape: f32[1,10], index: 8, kind: input, shape index: {}]
  %s9 = inlined_call_operand.vmem [shape: f32[16,10], index: 9, kind: output, shape index: {}]
  %s10 = sld [smem:[#allocation0]]
  $region46: #{net_forward.1} parent=0
    _
  %s12 = ssub.s32 1, %s10
  %s13 = scalar_select 0, %s12, %s10
  // Predicated region
  $region2: #{net_forward.1} parent=0 // pred_check
    _
  $region3: #{net_forward.1} parent=0 // pred_check_branch
    %15 = sbr.rel (0) target = $region5
  $region4: #{net_forward.1} parent=0 // pred_region
    _
  $region5: #{net_forward.1} parent=0 // pred_fallthru
    _
  // Predicated region
  $region6: #{net_forward.1} parent=0 // pred_check
    _
  $region7: #{net_forward.1} parent=0 // pred_check_branch
    %17 = sbr.rel (0) target = $region9
  $region8: #{net_forward.1} parent=0 // pred_region
    _
  $region9: #{net_forward.1} parent=0 // pred_fallthru
    _
  // Predicated region
  $region10: #{net_forward.1} parent=0 // pred_check
    _
  $region11: #{net_forward.1} parent=0 // pred_check_branch
    %19 = sbr.rel (0) target = $region13
  $region12: #{net_forward.1} parent=0 // pred_region
    _
  $region13: #{net_forward.1} parent=0 // pred_fallthru
    _
  // Predicated region
  $region14: #{net_forward.1} parent=0 // pred_check
    _
  $region15: #{net_forward.1} parent=0 // pred_check_branch
    %21 = sbr.rel (0) target = $region17
  $region16: #{net_forward.1} parent=0 // pred_region
    _
  $region17: #{net_forward.1} parent=0 // pred_fallthru
    _
  // Predicated region
  $region18: #{net_forward.1} parent=0 // pred_check
    _
  $region19: #{net_forward.1} parent=0 // pred_check_branch
    %23 = sbr.rel (0) target = $region21
  $region20: #{net_forward.1} parent=0 // pred_region
    _
  $region21: #{net_forward.1} parent=0 // pred_fallthru
    _
  // Predicated region
  $region22: #{net_forward.1} parent=0 // pred_check
    _
  $region23: #{net_forward.1} parent=0 // pred_check_branch
    %25 = sbr.rel (0) target = $region25
  $region24: #{net_forward.1} parent=0 // pred_region
    _
  $region25: #{net_forward.1} parent=0 // pred_fallthru
    _
  // Predicated region
  $region26: #{net_forward.1} parent=0 // pred_check
    _
  $region27: #{net_forward.1} parent=0 // pred_check_branch
    %27 = sbr.rel (0) target = $region29
  $region28: #{net_forward.1} parent=0 // pred_region
    _
  $region29: #{net_forward.1} parent=0 // pred_fallthru
    _
  // Predicated region
  $region30: #{net_forward.1} parent=0 // pred_check
    _
  $region31: #{net_forward.1} parent=0 // pred_check_branch
    %29 = sbr.rel (0) target = $region33
  $region32: #{net_forward.1} parent=0 // pred_region
    _
  $region33: #{net_forward.1} parent=0 // pred_fallthru
    _
  // Predicated region
  $region34: #{net_forward.1} parent=0 // pred_check
    _
  $region35: #{net_forward.1} parent=0 // pred_check_branch
    %31 = sbr.rel (0) target = $region37
  $region36: #{net_forward.1} parent=0 // pred_region
    _
  $region37: #{net_forward.1} parent=0 // pred_fallthru
    _
  %v33 = vld [vmem:[%s0] sm:$0xff]
  %v34 = vld [vmem:[%s0 + $0x8] sm:$0xff]
  %v35 = vld [vmem:[%s0 + $0x10] sm:$0xff]
  %v36 = vld [vmem:[%s0 + $0x18] sm:$0xff]
  %v37 = vld [vmem:[%s0 + $0x20] sm:$0xff]
  %v38 = vld [vmem:[%s0 + $0x28] sm:$0xff]
  %v39 = vld [vmem:[%s0 + $0x30] sm:$0xff]
  %v40 = vld [vmem:[%s0 + $0x38] sm:$0xff]
  %v41 = vld [vmem:[%s0 + $0x40] sm:$0xff]
  %v42 = vld [vmem:[%s0 + $0x48] sm:$0xff]
  %v43 = vld [vmem:[%s0 + $0x50] sm:$0xff]
  %v44 = vld [vmem:[%s0 + $0x58] sm:$0xff]
  %v45 = vld [vmem:[%s0 + $0x60] sm:$0xff]
  %v46 = vld [vmem:[%s0 + $0x68] sm:$0xff]
  %v47 = vld [vmem:[%s0 + $0x70] sm:$0xff]
  %v48 = vld [vmem:[%s0 + $0x78] sm:$0xff]
  %v49 = vld [vmem:[%s0 + $0x80] sm:$0xff]
  %v50 = vld [vmem:[%s0 + $0x88] sm:$0xff]
  %v51 = vld [vmem:[%s0 + $0x90] sm:$0xff]
  %v52 = vld [vmem:[%s0 + $0x98] sm:$0xff]
  %v53 = vld [vmem:[%s0 + $0xa0] sm:$0xff]
  %v54 = vld [vmem:[%s0 + $0xa8] sm:$0xff]
  %v55 = vld [vmem:[%s0 + $0xb0] sm:$0xff]
  %v56 = vld [vmem:[%s0 + $0xb8] sm:$0xff]
  %v57 = vld [vmem:[%s0 + $0xc0] sm:$0xff]
  %v58 = vld [vmem:[%s0 + $0xc8] sm:$0xff]
  %v59 = vld [vmem:[%s0 + $0xd0] sm:$0xff]
  %v60 = vld [vmem:[%s0 + $0xd8] sm:$0xff]
  %v61 = vld [vmem:[%s0 + $0xe0] sm:$0xff]
  %v62 = vld [vmem:[%s0 + $0xe8] sm:$0xff]
  %v63 = vld [vmem:[%s0 + $0xf0] sm:$0xff]
  %v64 = vld [vmem:[%s0 + $0xf8] sm:$0xff]
  %v65 = vld [vmem:[%s0 + $0x100] sm:$0xff]
  %v66 = vld [vmem:[%s0 + $0x108] sm:$0xff]
  %v67 = vld [vmem:[%s0 + $0x110] sm:$0xff]
  %v68 = vld [vmem:[%s0 + $0x118] sm:$0xff]
  %v69 = vld [vmem:[%s0 + $0x120] sm:$0xff]
  %v70 = vld [vmem:[%s0 + $0x128] sm:$0xff]
  %v71 = vld [vmem:[%s0 + $0x130] sm:$0xff]
  %v72 = vld [vmem:[%s0 + $0x138] sm:$0xff]
  %v73 = vld [vmem:[%s0 + $0x140] sm:$0xff]
  %v74 = vld [vmem:[%s0 + $0x148] sm:$0xff]
  %v75 = vld [vmem:[%s0 + $0x150] sm:$0xff]
  %v76 = vld [vmem:[%s0 + $0x158] sm:$0xff]
  %v77 = vld [vmem:[%s0 + $0x160] sm:$0xff]
  %v78 = vld [vmem:[%s0 + $0x168] sm:$0xff]
  %v79 = vld [vmem:[%s0 + $0x170] sm:$0xff]
  %v80 = vld [vmem:[%s0 + $0x178] sm:$0xff]
  %v81 = vld [vmem:[%s1] sm:$0xff]
  %v82 = vld [vmem:[%s1 + $0x8] sm:$0xff]
  %v83 = vld [vmem:[%s1 + $0x10] sm:$0xff]
  %v84 = vld [vmem:[%s1 + $0x18] sm:$0xff]
  %v85 = vld [vmem:[%s1 + $0x20] sm:$0xff]
  %v86 = vld [vmem:[%s1 + $0x28] sm:$0xff]
  %v87 = vld [vmem:[%s1 + $0x30] sm:$0xff]
  %v88 = vld [vmem:[%s1 + $0x38] sm:$0xff]
  %v89 = vld [vmem:[%s1 + $0x40] sm:$0xff]
  %v90 = vld [vmem:[%s1 + $0x48] sm:$0xff]
  %v91 = vld [vmem:[%s1 + $0x50] sm:$0xff]
  %v92 = vld [vmem:[%s1 + $0x58] sm:$0xff]
  %v93 = vld [vmem:[%s1 + $0x60] sm:$0xff]
  %v94 = vld [vmem:[%s1 + $0x68] sm:$0xff]
  %v95 = vld [vmem:[%s1 + $0x70] sm:$0xff]
  %v96 = vld [vmem:[%s1 + $0x78] sm:$0xff]
  %v97 = vld [vmem:[%s1 + $0x80] sm:$0xff]
  %v98 = vld [vmem:[%s1 + $0x88] sm:$0x33]
  %v147 = vunpack.c.l.b16 %v33
  %v148 = vunpack.c.h.b16 %v33
  %v149 = vunpack.c.l.b16 %v34
  %v150 = vunpack.c.h.b16 %v34
  %v151 = vunpack.c.l.b16 %v35
  %v152 = vunpack.c.h.b16 %v35
  %v153 = vunpack.c.l.b16 %v36
  %v154 = vunpack.c.h.b16 %v36
  %v155 = vunpack.c.l.b16 %v37
  %v156 = vunpack.c.h.b16 %v37
  %v157 = vunpack.c.l.b16 %v38
  %v158 = vunpack.c.h.b16 %v38
  %v159 = vunpack.c.l.b16 %v39
  %v160 = vunpack.c.h.b16 %v39
  %v161 = vunpack.c.l.b16 %v40
  %v162 = vunpack.c.h.b16 %v40
  %v163 = vunpack.c.l.b16 %v41
  %v164 = vunpack.c.h.b16 %v41
  %v165 = vunpack.c.l.b16 %v42
  %v166 = vunpack.c.h.b16 %v42
  %v167 = vunpack.c.l.b16 %v43
  %v168 = vunpack.c.h.b16 %v43
  %v169 = vunpack.c.l.b16 %v44
  %v170 = vunpack.c.h.b16 %v44
  %v171 = vunpack.c.l.b16 %v45
  %v172 = vunpack.c.h.b16 %v45
  %v173 = vunpack.c.l.b16 %v46
  %v174 = vunpack.c.h.b16 %v46
  %v175 = vunpack.c.l.b16 %v47
  %v176 = vunpack.c.h.b16 %v47
  %v177 = vunpack.c.l.b16 %v48
  %v178 = vunpack.c.h.b16 %v48
  %v179 = vunpack.c.l.b16 %v49
  %v180 = vunpack.c.h.b16 %v49
  %v181 = vunpack.c.l.b16 %v50
  %v182 = vunpack.c.h.b16 %v50
  %v183 = vunpack.c.l.b16 %v51
  %v184 = vunpack.c.h.b16 %v51
  %v185 = vunpack.c.l.b16 %v52
  %v186 = vunpack.c.h.b16 %v52
  %v187 = vunpack.c.l.b16 %v53
  %v188 = vunpack.c.h.b16 %v53
  %v189 = vunpack.c.l.b16 %v54
  %v190 = vunpack.c.h.b16 %v54
  %v191 = vunpack.c.l.b16 %v55
  %v192 = vunpack.c.h.b16 %v55
  %v193 = vunpack.c.l.b16 %v56
  %v194 = vunpack.c.h.b16 %v56
  %v195 = vunpack.c.l.b16 %v57
  %v196 = vunpack.c.h.b16 %v57
  %v197 = vunpack.c.l.b16 %v58
  %v198 = vunpack.c.h.b16 %v58
  %v199 = vunpack.c.l.b16 %v59
  %v200 = vunpack.c.h.b16 %v59
  %v201 = vunpack.c.l.b16 %v60
  %v202 = vunpack.c.h.b16 %v60
  %v203 = vunpack.c.l.b16 %v61
  %v204 = vunpack.c.h.b16 %v61
  %v205 = vunpack.c.l.b16 %v62
  %v206 = vunpack.c.h.b16 %v62
  %v207 = vunpack.c.l.b16 %v63
  %v208 = vunpack.c.h.b16 %v63
  %v209 = vunpack.c.l.b16 %v64
  %v210 = vunpack.c.h.b16 %v64
  %v211 = vunpack.c.l.b16 %v65
  %v212 = vunpack.c.h.b16 %v65
  %v213 = vunpack.c.l.b16 %v66
  %v214 = vunpack.c.h.b16 %v66
  %v215 = vunpack.c.l.b16 %v67
  %v216 = vunpack.c.h.b16 %v67
  %v217 = vunpack.c.l.b16 %v68
  %v218 = vunpack.c.h.b16 %v68
  %v219 = vunpack.c.l.b16 %v69
  %v220 = vunpack.c.h.b16 %v69
  %v221 = vunpack.c.l.b16 %v70
  %v222 = vunpack.c.h.b16 %v70
  %v223 = vunpack.c.l.b16 %v71
  %v224 = vunpack.c.h.b16 %v71
  %v225 = vunpack.c.l.b16 %v72
  %v226 = vunpack.c.h.b16 %v72
  %v227 = vunpack.c.l.b16 %v73
  %v228 = vunpack.c.h.b16 %v73
  %v229 = vunpack.c.l.b16 %v74
  %v230 = vunpack.c.h.b16 %v74
  %v231 = vunpack.c.l.b16 %v75
  %v232 = vunpack.c.h.b16 %v75
  %v233 = vunpack.c.l.b16 %v76
  %v234 = vunpack.c.h.b16 %v76
  %v235 = vunpack.c.l.b16 %v77
  %v236 = vunpack.c.h.b16 %v77
  %v237 = vunpack.c.l.b16 %v78
  %v238 = vunpack.c.h.b16 %v78
  %v239 = vunpack.c.l.b16 %v79
  %v240 = vunpack.c.h.b16 %v79
  %v241 = vunpack.c.l.b16 %v80
  %v242 = vunpack.c.h.b16 %v80
  %v243 = vpack.c.b16 %v149, %v147
  %v244 = vpack.c.b16 %v150, %v148
  %v245 = vpack.c.b16 %v153, %v151
  %v246 = vpack.c.b16 %v154, %v152
  %v247 = vpack.c.b16 %v157, %v155
  %v248 = vpack.c.b16 %v158, %v156
  %v249 = vpack.c.b16 %v161, %v159
  %v250 = vpack.c.b16 %v162, %v160
  %v251 = vpack.c.b16 %v165, %v163
  %v252 = vpack.c.b16 %v166, %v164
  %v253 = vpack.c.b16 %v169, %v167
  %v254 = vpack.c.b16 %v170, %v168
  %v255 = vpack.c.b16 %v173, %v171
  %v256 = vpack.c.b16 %v174, %v172
  %v257 = vpack.c.b16 %v177, %v175
  %v258 = vpack.c.b16 %v178, %v176
  %v259 = vpack.c.b16 %v181, %v179
  %v260 = vpack.c.b16 %v182, %v180
  %v261 = vpack.c.b16 %v185, %v183
  %v262 = vpack.c.b16 %v186, %v184
  %v263 = vpack.c.b16 %v189, %v187
  %v264 = vpack.c.b16 %v190, %v188
  %v265 = vpack.c.b16 %v193, %v191
  %v266 = vpack.c.b16 %v194, %v192
  %v267 = vpack.c.b16 %v197, %v195
  %v268 = vpack.c.b16 %v198, %v196
  %v269 = vpack.c.b16 %v201, %v199
  %v270 = vpack.c.b16 %v202, %v200
  %v271 = vpack.c.b16 %v205, %v203
  %v272 = vpack.c.b16 %v206, %v204
  %v273 = vpack.c.b16 %v209, %v207
  %v274 = vpack.c.b16 %v210, %v208
  %v275 = vpack.c.b16 %v213, %v211
  %v276 = vpack.c.b16 %v214, %v212
  %v277 = vpack.c.b16 %v217, %v215
  %v278 = vpack.c.b16 %v218, %v216
  %v279 = vpack.c.b16 %v221, %v219
  %v280 = vpack.c.b16 %v222, %v220
  %v281 = vpack.c.b16 %v225, %v223
  %v282 = vpack.c.b16 %v226, %v224
  %v283 = vpack.c.b16 %v229, %v227
  %v284 = vpack.c.b16 %v230, %v228
  %v285 = vpack.c.b16 %v233, %v231
  %v286 = vpack.c.b16 %v234, %v232
  %v287 = vpack.c.b16 %v237, %v235
  %v288 = vpack.c.b16 %v238, %v236
  %v289 = vpack.c.b16 %v241, %v239
  %v290 = vpack.c.b16 %v242, %v240
  %v333 = vunpack.c.l.b16 %v81
  %v334 = vunpack.c.h.b16 %v81
  %v335 = vunpack.c.l.b16 %v82
  %v336 = vunpack.c.h.b16 %v82
  %v337 = vunpack.c.l.b16 %v83
  %v338 = vunpack.c.h.b16 %v83
  %v339 = vunpack.c.l.b16 %v84
  %v340 = vunpack.c.h.b16 %v84
  %v341 = vunpack.c.l.b16 %v85
  %v342 = vunpack.c.h.b16 %v85
  %v343 = vunpack.c.l.b16 %v86
  %v344 = vunpack.c.h.b16 %v86
  %v345 = vunpack.c.l.b16 %v87
  %v346 = vunpack.c.h.b16 %v87
  %v347 = vunpack.c.l.b16 %v88
  %v348 = vunpack.c.h.b16 %v88
  %v349 = vunpack.c.l.b16 %v89
  %v350 = vunpack.c.h.b16 %v89
  %v351 = vunpack.c.l.b16 %v90
  %v352 = vunpack.c.h.b16 %v90
  %v353 = vunpack.c.l.b16 %v91
  %v354 = vunpack.c.h.b16 %v91
  %v355 = vunpack.c.l.b16 %v92
  %v356 = vunpack.c.h.b16 %v92
  %v357 = vunpack.c.l.b16 %v93
  %v358 = vunpack.c.h.b16 %v93
  %v359 = vunpack.c.l.b16 %v94
  %v360 = vunpack.c.h.b16 %v94
  %v361 = vunpack.c.l.b16 %v95
  %v362 = vunpack.c.h.b16 %v95
  %v363 = vunpack.c.l.b16 %v96
  %v364 = vunpack.c.h.b16 %v96
  %v365 = vunpack.c.l.b16 %v97
  %v366 = vunpack.c.h.b16 %v97
  %v367 = vunpack.c.l.b16 %v98
  %v368 = vunpack.c.h.b16 %v98
  %v369 = vpack.c.b16 %v335, %v333
  %v370 = vpack.c.b16 %v336, %v334
  %v371 = vpack.c.b16 %v339, %v337
  %v372 = vpack.c.b16 %v340, %v338
  %v373 = vpack.c.b16 %v343, %v341
  %v374 = vpack.c.b16 %v344, %v342
  %v375 = vpack.c.b16 %v347, %v345
  %v376 = vpack.c.b16 %v348, %v346
  %v377 = vpack.c.b16 %v351, %v349
  %v378 = vpack.c.b16 %v352, %v350
  %v379 = vpack.c.b16 %v355, %v353
  %v380 = vpack.c.b16 %v356, %v354
  %v381 = vpack.c.b16 %v359, %v357
  %v382 = vpack.c.b16 %v360, %v358
  %v383 = vpack.c.b16 %v363, %v361
  %v384 = vpack.c.b16 %v364, %v362
  %v385 = vpack.c.b16 %v367, %v365
  %v386 = vpack.c.b16 %v368, %v366
  %vm403 = vcmask 97280
  %v405 = vsel %vm403, %v244, 0
  %v408 = vsel %vm403, %v246, 0
  %v411 = vsel %vm403, %v248, 0
  %v414 = vsel %vm403, %v250, 0
  %v417 = vsel %vm403, %v252, 0
  %v420 = vsel %vm403, %v254, 0
  %v423 = vsel %vm403, %v256, 0
  %v426 = vsel %vm403, %v258, 0
  %v429 = vsel %vm403, %v260, 0
  %v432 = vsel %vm403, %v262, 0
  %v435 = vsel %vm403, %v264, 0
  %v438 = vsel %vm403, %v266, 0
  %v441 = vsel %vm403, %v268, 0
  %v444 = vsel %vm403, %v270, 0
  %v447 = vsel %vm403, %v272, 0
  %v450 = vsel %vm403, %v274, 0
  %v453 = vsel %vm403, %v276, 0
  %v456 = vsel %vm403, %v278, 0
  %v459 = vsel %vm403, %v280, 0
  %v462 = vsel %vm403, %v282, 0
  %v465 = vsel %vm403, %v284, 0
  %v468 = vsel %vm403, %v286, 0
  %v471 = vsel %vm403, %v288, 0
  %v474 = vsel %vm403, %v290, 0
  %vm476 = vcmask 1045504
  %v478 = vsel %vm476, %v385, 0
  %v481 = vsel %vm476, %v386, 0
  %483 = vmatprep.subr.bf16.mxu0 %v384
  %484 = vmatpush1.bf16.msra.mxu0 %v383
  %485 = vmatprep.subr.bf16.mxu0 %v382
  %486 = vmatpush1.bf16.msra.mxu0 %v381
  %487 = vmatprep.subr.bf16.mxu0 %v380
  %488 = vmatpush1.bf16.msra.mxu0 %v379
  %489 = vmatprep.subr.bf16.mxu0 %v378
  %490 = vmatpush1.bf16.msra.mxu0 %v377
  %491 = vmatprep.subr.bf16.mxu0 %v376
  %492 = vmatpush1.bf16.msra.mxu0 %v375
  %493 = vmatprep.subr.bf16.mxu0 %v374
  %494 = vmatpush1.bf16.msra.mxu0 %v373
  %495 = vmatprep.subr.bf16.mxu0 %v372
  %496 = vmatpush1.bf16.msra.mxu0 %v371
  %497 = vmatprep.subr.bf16.mxu0 %v370
  %498 = vmatpush1.bf16.msra.mxu0 %v369
  %499 = vmatprep.subr.bf16.mxu0 0
  %500 = vmatpush2.bf16.msra.mxu0 0
  %501 = vmatprep.subr.bf16.mxu0 0
  %502 = vmatpush2.bf16.msra.mxu0 0
  %503 = vmatprep.subr.bf16.mxu0 0
  %504 = vmatpush2.bf16.msra.mxu0 0
  %505 = vmatprep.subr.bf16.mxu0 0
  %506 = vmatpush2.bf16.msra.mxu0 0
  %507 = vmatprep.subr.bf16.mxu0 0
  %508 = vmatpush2.bf16.msra.mxu0 0
  %509 = vmatprep.subr.bf16.mxu0 0
  %510 = vmatpush2.bf16.msra.mxu0 0
  %511 = vmatprep.subr.bf16.mxu0 0
  %512 = vmatpush2.bf16.msra.mxu0 0
  %513 = vmatprep.subr.bf16.mxu0 %v481
  %514 = vmatpush2.bf16.msra.mxu0 %v478
  %515 = vmatprep.mubr.bf16.mxu0 %v405
  %516 = vmatmul.mubr.bf16.gmra.mxu0 %v243
  %v517 = vpop.f32.mrf.mxu0
  %v518 = vadd.f32 0.0, %v517
  %v519 = vpop.f32.mrf.mxu0
  %v520 = vadd.f32 0.0, %v519
  %v521 = vpop.f32.mrf.mxu0
  %v522 = vadd.f32 0.0, %v521
  %v523 = vpop.f32.mrf.mxu0
  %v524 = vadd.f32 0.0, %v523
  %525 = vmatprep.mubr.bf16.mxu0 %v408
  %526 = vmatmul.mubr.bf16.gmra.mxu0 %v245
  %v527 = vpop.f32.mrf.mxu0
  %v528 = vadd.f32 0.0, %v527
  %v529 = vpop.f32.mrf.mxu0
  %v530 = vadd.f32 0.0, %v529
  %v531 = vpop.f32.mrf.mxu0
  %v532 = vadd.f32 0.0, %v531
  %v533 = vpop.f32.mrf.mxu0
  %v534 = vadd.f32 0.0, %v533
  %535 = vmatprep.mubr.bf16.mxu0 %v411
  %536 = vmatmul.mubr.bf16.gmra.mxu0 %v247
  %v537 = vpop.f32.mrf.mxu0
  %v538 = vadd.f32 0.0, %v537
  %v539 = vpop.f32.mrf.mxu0
  %v540 = vadd.f32 0.0, %v539
  %v541 = vpop.f32.mrf.mxu0
  %v542 = vadd.f32 0.0, %v541
  %v543 = vpop.f32.mrf.mxu0
  %v544 = vadd.f32 0.0, %v543
  %545 = vmatprep.mubr.bf16.mxu0 %v414
  %546 = vmatmul.mubr.bf16.gmra.mxu0 %v249
  %v547 = vpop.f32.mrf.mxu0
  %v548 = vadd.f32 0.0, %v547
  %v549 = vpop.f32.mrf.mxu0
  %v550 = vadd.f32 0.0, %v549
  %v551 = vpop.f32.mrf.mxu0
  %v552 = vadd.f32 0.0, %v551
  %v553 = vpop.f32.mrf.mxu0
  %v554 = vadd.f32 0.0, %v553
  %555 = vmatprep.mubr.bf16.mxu0 %v417
  %556 = vmatmul.mubr.bf16.gmra.mxu0 %v251
  %v557 = vpop.f32.mrf.mxu0
  %v558 = vadd.f32 0.0, %v557
  %v559 = vpop.f32.mrf.mxu0
  %v560 = vadd.f32 0.0, %v559
  %v561 = vpop.f32.mrf.mxu0
  %v562 = vadd.f32 0.0, %v561
  %v563 = vpop.f32.mrf.mxu0
  %v564 = vadd.f32 0.0, %v563
  %565 = vmatprep.mubr.bf16.mxu0 %v420
  %566 = vmatmul.mubr.bf16.gmra.mxu0 %v253
  %v567 = vpop.f32.mrf.mxu0
  %v568 = vadd.f32 0.0, %v567
  %v569 = vpop.f32.mrf.mxu0
  %v570 = vadd.f32 0.0, %v569
  %v571 = vpop.f32.mrf.mxu0
  %v572 = vadd.f32 0.0, %v571
  %v573 = vpop.f32.mrf.mxu0
  %v574 = vadd.f32 0.0, %v573
  %575 = vmatprep.mubr.bf16.mxu0 %v423
  %576 = vmatmul.mubr.bf16.gmra.mxu0 %v255
  %v577 = vpop.f32.mrf.mxu0
  %v578 = vadd.f32 0.0, %v577
  %v579 = vpop.f32.mrf.mxu0
  %v580 = vadd.f32 0.0, %v579
  %v581 = vpop.f32.mrf.mxu0
  %v582 = vadd.f32 0.0, %v581
  %v583 = vpop.f32.mrf.mxu0
  %v584 = vadd.f32 0.0, %v583
  %585 = vmatprep.mubr.bf16.mxu0 %v426
  %586 = vmatmul.mubr.bf16.gmra.mxu0 %v257
  %v587 = vpop.f32.mrf.mxu0
  %v588 = vadd.f32 0.0, %v587
  %v589 = vpop.f32.mrf.mxu0
  %v590 = vadd.f32 0.0, %v589
  %v591 = vpop.f32.mrf.mxu0
  %v592 = vadd.f32 0.0, %v591
  %v593 = vpop.f32.mrf.mxu0
  %v594 = vadd.f32 0.0, %v593
  %595 = vmatprep.mubr.bf16.mxu0 %v429
  %596 = vmatmul.mubr.bf16.gmra.mxu0 %v259
  %v597 = vpop.f32.mrf.mxu0
  %v598 = vadd.f32 0.0, %v597
  %v599 = vpop.f32.mrf.mxu0
  %v600 = vadd.f32 0.0, %v599
  %v601 = vpop.f32.mrf.mxu0
  %v602 = vadd.f32 0.0, %v601
  %v603 = vpop.f32.mrf.mxu0
  %v604 = vadd.f32 0.0, %v603
  %605 = vmatprep.mubr.bf16.mxu0 %v432
  %606 = vmatmul.mubr.bf16.gmra.mxu0 %v261
  %v607 = vpop.f32.mrf.mxu0
  %v608 = vadd.f32 0.0, %v607
  %v609 = vpop.f32.mrf.mxu0
  %v610 = vadd.f32 0.0, %v609
  %v611 = vpop.f32.mrf.mxu0
  %v612 = vadd.f32 0.0, %v611
  %v613 = vpop.f32.mrf.mxu0
  %v614 = vadd.f32 0.0, %v613
  %615 = vmatprep.mubr.bf16.mxu0 %v435
  %616 = vmatmul.mubr.bf16.gmra.mxu0 %v263
  %v617 = vpop.f32.mrf.mxu0
  %v618 = vadd.f32 0.0, %v617
  %v619 = vpop.f32.mrf.mxu0
  %v620 = vadd.f32 0.0, %v619
  %v621 = vpop.f32.mrf.mxu0
  %v622 = vadd.f32 0.0, %v621
  %v623 = vpop.f32.mrf.mxu0
  %v624 = vadd.f32 0.0, %v623
  %625 = vmatprep.mubr.bf16.mxu0 %v438
  %626 = vmatmul.mubr.bf16.gmra.mxu0 %v265
  %v627 = vpop.f32.mrf.mxu0
  %v628 = vadd.f32 0.0, %v627
  %v629 = vpop.f32.mrf.mxu0
  %v630 = vadd.f32 0.0, %v629
  %v631 = vpop.f32.mrf.mxu0
  %v632 = vadd.f32 0.0, %v631
  %v633 = vpop.f32.mrf.mxu0
  %v634 = vadd.f32 0.0, %v633
  %635 = vmatprep.mubr.bf16.mxu0 %v441
  %636 = vmatmul.mubr.bf16.gmra.mxu0 %v267
  %v637 = vpop.f32.mrf.mxu0
  %v638 = vadd.f32 0.0, %v637
  %v639 = vpop.f32.mrf.mxu0
  %v640 = vadd.f32 0.0, %v639
  %v641 = vpop.f32.mrf.mxu0
  %v642 = vadd.f32 0.0, %v641
  %v643 = vpop.f32.mrf.mxu0
  %v644 = vadd.f32 0.0, %v643
  %645 = vmatprep.mubr.bf16.mxu0 %v444
  %646 = vmatmul.mubr.bf16.gmra.mxu0 %v269
  %v647 = vpop.f32.mrf.mxu0
  %v648 = vadd.f32 0.0, %v647
  %v649 = vpop.f32.mrf.mxu0
  %v650 = vadd.f32 0.0, %v649
  %v651 = vpop.f32.mrf.mxu0
  %v652 = vadd.f32 0.0, %v651
  %v653 = vpop.f32.mrf.mxu0
  %v654 = vadd.f32 0.0, %v653
  %655 = vmatprep.mubr.bf16.mxu0 %v447
  %656 = vmatmul.mubr.bf16.gmra.mxu0 %v271
  %v657 = vpop.f32.mrf.mxu0
  %v658 = vadd.f32 0.0, %v657
  %v659 = vpop.f32.mrf.mxu0
  %v660 = vadd.f32 0.0, %v659
  %v661 = vpop.f32.mrf.mxu0
  %v662 = vadd.f32 0.0, %v661
  %v663 = vpop.f32.mrf.mxu0
  %v664 = vadd.f32 0.0, %v663
  %665 = vmatprep.mubr.bf16.mxu0 %v450
  %666 = vmatmul.mubr.bf16.gmra.mxu0 %v273
  %v667 = vpop.f32.mrf.mxu0
  %v668 = vadd.f32 0.0, %v667
  %v669 = vpop.f32.mrf.mxu0
  %v670 = vadd.f32 0.0, %v669
  %v671 = vpop.f32.mrf.mxu0
  %v672 = vadd.f32 0.0, %v671
  %v673 = vpop.f32.mrf.mxu0
  %v674 = vadd.f32 0.0, %v673
  %675 = vmatprep.mubr.bf16.mxu0 %v453
  %676 = vmatmul.mubr.bf16.gmra.mxu0 %v275
  %v677 = vpop.f32.mrf.mxu0
  %v678 = vadd.f32 0.0, %v677
  %v679 = vpop.f32.mrf.mxu0
  %v680 = vadd.f32 0.0, %v679
  %v681 = vpop.f32.mrf.mxu0
  %v682 = vadd.f32 0.0, %v681
  %v683 = vpop.f32.mrf.mxu0
  %v684 = vadd.f32 0.0, %v683
  %685 = vmatprep.mubr.bf16.mxu0 %v456
  %686 = vmatmul.mubr.bf16.gmra.mxu0 %v277
  %v687 = vpop.f32.mrf.mxu0
  %v688 = vadd.f32 0.0, %v687
  %v689 = vpop.f32.mrf.mxu0
  %v690 = vadd.f32 0.0, %v689
  %v691 = vpop.f32.mrf.mxu0
  %v692 = vadd.f32 0.0, %v691
  %v693 = vpop.f32.mrf.mxu0
  %v694 = vadd.f32 0.0, %v693
  %695 = vmatprep.mubr.bf16.mxu0 %v459
  %696 = vmatmul.mubr.bf16.gmra.mxu0 %v279
  %v697 = vpop.f32.mrf.mxu0
  %v698 = vadd.f32 0.0, %v697
  %v699 = vpop.f32.mrf.mxu0
  %v700 = vadd.f32 0.0, %v699
  %v701 = vpop.f32.mrf.mxu0
  %v702 = vadd.f32 0.0, %v701
  %v703 = vpop.f32.mrf.mxu0
  %v704 = vadd.f32 0.0, %v703
  %705 = vmatprep.mubr.bf16.mxu0 %v462
  %706 = vmatmul.mubr.bf16.gmra.mxu0 %v281
  %v707 = vpop.f32.mrf.mxu0
  %v708 = vadd.f32 0.0, %v707
  %v709 = vpop.f32.mrf.mxu0
  %v710 = vadd.f32 0.0, %v709
  %v711 = vpop.f32.mrf.mxu0
  %v712 = vadd.f32 0.0, %v711
  %v713 = vpop.f32.mrf.mxu0
  %v714 = vadd.f32 0.0, %v713
  %715 = vmatprep.mubr.bf16.mxu0 %v465
  %716 = vmatmul.mubr.bf16.gmra.mxu0 %v283
  %v717 = vpop.f32.mrf.mxu0
  %v718 = vadd.f32 0.0, %v717
  %v719 = vpop.f32.mrf.mxu0
  %v720 = vadd.f32 0.0, %v719
  %v721 = vpop.f32.mrf.mxu0
  %v722 = vadd.f32 0.0, %v721
  %v723 = vpop.f32.mrf.mxu0
  %v724 = vadd.f32 0.0, %v723
  %725 = vmatprep.mubr.bf16.mxu0 %v468
  %726 = vmatmul.mubr.bf16.gmra.mxu0 %v285
  %v727 = vpop.f32.mrf.mxu0
  %v728 = vadd.f32 0.0, %v727
  %v729 = vpop.f32.mrf.mxu0
  %v730 = vadd.f32 0.0, %v729
  %v731 = vpop.f32.mrf.mxu0
  %v732 = vadd.f32 0.0, %v731
  %v733 = vpop.f32.mrf.mxu0
  %v734 = vadd.f32 0.0, %v733
  %735 = vmatprep.mubr.bf16.mxu0 %v471
  %736 = vmatmul.mubr.bf16.gmra.mxu0 %v287
  %v737 = vpop.f32.mrf.mxu0
  %v738 = vadd.f32 0.0, %v737
  %v739 = vpop.f32.mrf.mxu0
  %v740 = vadd.f32 0.0, %v739
  %v741 = vpop.f32.mrf.mxu0
  %v742 = vadd.f32 0.0, %v741
  %v743 = vpop.f32.mrf.mxu0
  %v744 = vadd.f32 0.0, %v743
  %745 = vmatprep.mubr.bf16.mxu0 %v474
  %746 = vmatmul.mubr.bf16.gmra.mxu0 %v289
  %v747 = vpop.f32.mrf.mxu0
  %v748 = vadd.f32 0.0, %v747
  %v749 = vpop.f32.mrf.mxu0
  %v750 = vadd.f32 0.0, %v749
  %v751 = vpop.f32.mrf.mxu0
  %v752 = vadd.f32 0.0, %v751
  %v753 = vpop.f32.mrf.mxu0
  %v754 = vadd.f32 0.0, %v753
  %755 = vdwg.mxu0
  %v756 = vmax.f32 %v518, %v520
  %v757 = vmax.f32 %v522, %v524
  %v758 = vmax.f32 %v528, %v530
  %v759 = vmax.f32 %v532, %v534
  %v760 = vmax.f32 %v538, %v540
  %v761 = vmax.f32 %v542, %v544
  %v762 = vmax.f32 %v548, %v550
  %v763 = vmax.f32 %v552, %v554
  %v764 = vmax.f32 %v558, %v560
  %v765 = vmax.f32 %v562, %v564
  %v766 = vmax.f32 %v568, %v570
  %v767 = vmax.f32 %v572, %v574
  %v768 = vmax.f32 %v578, %v580
  %v769 = vmax.f32 %v582, %v584
  %v770 = vmax.f32 %v588, %v590
  %v771 = vmax.f32 %v592, %v594
  %v772 = vmax.f32 %v598, %v600
  %v773 = vmax.f32 %v602, %v604
  %v774 = vmax.f32 %v608, %v610
  %v775 = vmax.f32 %v612, %v614
  %v776 = vmax.f32 %v618, %v620
  %v777 = vmax.f32 %v622, %v624
  %v778 = vmax.f32 %v628, %v630
  %v779 = vmax.f32 %v632, %v634
  %v780 = vmax.f32 %v638, %v640
  %v781 = vmax.f32 %v642, %v644
  %v782 = vmax.f32 %v648, %v650
  %v783 = vmax.f32 %v652, %v654
  %v784 = vmax.f32 %v658, %v660
  %v785 = vmax.f32 %v662, %v664
  %v786 = vmax.f32 %v668, %v670
  %v787 = vmax.f32 %v672, %v674
  %v788 = vmax.f32 %v678, %v680
  %v789 = vmax.f32 %v682, %v684
  %v790 = vmax.f32 %v688, %v690
  %v791 = vmax.f32 %v692, %v694
  %v792 = vmax.f32 %v698, %v700
  %v793 = vmax.f32 %v702, %v704
  %v794 = vmax.f32 %v708, %v710
  %v795 = vmax.f32 %v712, %v714
  %v796 = vmax.f32 %v718, %v720
  %v797 = vmax.f32 %v722, %v724
  %v798 = vmax.f32 %v728, %v730
  %v799 = vmax.f32 %v732, %v734
  %v800 = vmax.f32 %v738, %v740
  %v801 = vmax.f32 %v742, %v744
  %v802 = vmax.f32 %v748, %v750
  %v803 = vmax.f32 %v752, %v754
  %v804 = vmax.f32 %v756, %v780
  %v805 = vmax.f32 %v757, %v781
  %v806 = vmax.f32 %v758, %v782
  %v807 = vmax.f32 %v759, %v783
  %v808 = vmax.f32 %v760, %v784
  %v809 = vmax.f32 %v761, %v785
  %v810 = vmax.f32 %v762, %v786
  %v811 = vmax.f32 %v763, %v787
  %v812 = vmax.f32 %v764, %v788
  %v813 = vmax.f32 %v765, %v789
  %v814 = vmax.f32 %v766, %v790
  %v815 = vmax.f32 %v767, %v791
  %v816 = vmax.f32 %v768, %v792
  %v817 = vmax.f32 %v769, %v793
  %v818 = vmax.f32 %v770, %v794
  %v819 = vmax.f32 %v771, %v795
  %v820 = vmax.f32 %v772, %v796
  %v821 = vmax.f32 %v773, %v797
  %v822 = vmax.f32 %v774, %v798
  %v823 = vmax.f32 %v775, %v799
  %v824 = vmax.f32 %v776, %v800
  %v825 = vmax.f32 %v777, %v801
  %v826 = vmax.f32 %v778, %v802
  %v827 = vmax.f32 %v779, %v803
  %v828 = vld [vmem:[%s2] sm:$0x1]
  %v830 = vlaneseq
  %v831 = vshrl.u32 %v830, 7
  %v832 = vsub.s32 0, %v831
  %v833 = vrot.slane %v828, %v832
  %v835 = vadd.f32 %v804, %v833
  %v836 = vadd.f32 %v805, %v833
  %v837 = vadd.f32 %v806, %v833
  %v838 = vadd.f32 %v807, %v833
  %v839 = vadd.f32 %v808, %v833
  %v840 = vadd.f32 %v809, %v833
  %v841 = vadd.f32 %v810, %v833
  %v842 = vadd.f32 %v811, %v833
  %v843 = vadd.f32 %v812, %v833
  %v844 = vadd.f32 %v813, %v833
  %v845 = vadd.f32 %v814, %v833
  %v846 = vadd.f32 %v815, %v833
  %v847 = vadd.f32 %v816, %v833
  %v848 = vadd.f32 %v817, %v833
  %v849 = vadd.f32 %v818, %v833
  %v850 = vadd.f32 %v819, %v833
  %v851 = vadd.f32 %v820, %v833
  %v852 = vadd.f32 %v821, %v833
  %v853 = vadd.f32 %v822, %v833
  %v854 = vadd.f32 %v823, %v833
  %v855 = vadd.f32 %v824, %v833
  %v856 = vadd.f32 %v825, %v833
  %v857 = vadd.f32 %v826, %v833
  %v858 = vadd.f32 %v827, %v833
  %v859 = vmax.f32 %v835, 0.0
  %v860 = vmax.f32 %v836, 0.0
  %v861 = vmax.f32 %v837, 0.0
  %v862 = vmax.f32 %v838, 0.0
  %v863 = vmax.f32 %v839, 0.0
  %v864 = vmax.f32 %v840, 0.0
  %v865 = vmax.f32 %v841, 0.0
  %v866 = vmax.f32 %v842, 0.0
  %v867 = vmax.f32 %v843, 0.0
  %v868 = vmax.f32 %v844, 0.0
  %v869 = vmax.f32 %v845, 0.0
  %v870 = vmax.f32 %v846, 0.0
  %v871 = vmax.f32 %v847, 0.0
  %v872 = vmax.f32 %v848, 0.0
  %v873 = vmax.f32 %v849, 0.0
  %v874 = vmax.f32 %v850, 0.0
  %v875 = vmax.f32 %v851, 0.0
  %v876 = vmax.f32 %v852, 0.0
  %v877 = vmax.f32 %v853, 0.0
  %v878 = vmax.f32 %v854, 0.0
  %v879 = vmax.f32 %v855, 0.0
  %v880 = vmax.f32 %v856, 0.0
  %v881 = vmax.f32 %v857, 0.0
  %v882 = vmax.f32 %v858, 0.0
  %v883 = vpack.c.bf16 %v860, %v859
  %v884 = vpack.c.bf16 %v862, %v861
  %v885 = vpack.c.bf16 %v864, %v863
  %v886 = vpack.c.bf16 %v866, %v865
  %v887 = vpack.c.bf16 %v868, %v867
  %v888 = vpack.c.bf16 %v870, %v869
  %v889 = vpack.c.bf16 %v872, %v871
  %v890 = vpack.c.bf16 %v874, %v873
  %v891 = vpack.c.bf16 %v876, %v875
  %v892 = vpack.c.bf16 %v878, %v877
  %v893 = vpack.c.bf16 %v880, %v879
  %v894 = vpack.c.bf16 %v882, %v881
  %v907 = vunpack.c.l.b16 %v883
  %v908 = vunpack.c.h.b16 %v883
  %v909 = vunpack.c.l.b16 %v884
  %v910 = vunpack.c.h.b16 %v884
  %v911 = vunpack.c.l.b16 %v885
  %v912 = vunpack.c.h.b16 %v885
  %v913 = vunpack.c.l.b16 %v886
  %v914 = vunpack.c.h.b16 %v886
  %v915 = vunpack.c.l.b16 %v887
  %v916 = vunpack.c.h.b16 %v887
  %v917 = vunpack.c.l.b16 %v888
  %v918 = vunpack.c.h.b16 %v888
  %v919 = vunpack.c.l.b16 %v889
  %v920 = vunpack.c.h.b16 %v889
  %v921 = vunpack.c.l.b16 %v890
  %v922 = vunpack.c.h.b16 %v890
  %v923 = vunpack.c.l.b16 %v891
  %v924 = vunpack.c.h.b16 %v891
  %v925 = vunpack.c.l.b16 %v892
  %v926 = vunpack.c.h.b16 %v892
  %v927 = vunpack.c.l.b16 %v893
  %v928 = vunpack.c.h.b16 %v893
  %v929 = vunpack.c.l.b16 %v894
  %v930 = vunpack.c.h.b16 %v894
  %v931 = vpack.c.b16 %v907, %v907
  %v932 = vpack.c.b16 %v908, %v908
  %v933 = vpack.c.b16 %v909, %v909
  %v934 = vpack.c.b16 %v910, %v910
  %v935 = vpack.c.b16 %v911, %v911
  %v936 = vpack.c.b16 %v912, %v912
  %v937 = vpack.c.b16 %v913, %v913
  %v938 = vpack.c.b16 %v914, %v914
  %v939 = vpack.c.b16 %v915, %v915
  %v940 = vpack.c.b16 %v916, %v916
  %v941 = vpack.c.b16 %v917, %v917
  %v942 = vpack.c.b16 %v918, %v918
  %v943 = vpack.c.b16 %v919, %v919
  %v944 = vpack.c.b16 %v920, %v920
  %v945 = vpack.c.b16 %v921, %v921
  %v946 = vpack.c.b16 %v922, %v922
  %v947 = vpack.c.b16 %v923, %v923
  %v948 = vpack.c.b16 %v924, %v924
  %v949 = vpack.c.b16 %v925, %v925
  %v950 = vpack.c.b16 %v926, %v926
  %v951 = vpack.c.b16 %v927, %v927
  %v952 = vpack.c.b16 %v928, %v928
  %v953 = vpack.c.b16 %v929, %v929
  %v954 = vpack.c.b16 %v930, %v930
  %979 = vst [vmem:[#allocation2] sm:$0xf] %v931
  %980 = vst [vmem:[#allocation2 + $0x4] sm:$0xf] %v932
  %981 = vst [vmem:[#allocation2 + $0x8] sm:$0xf] %v933
  %982 = vst [vmem:[#allocation2 + $0xc] sm:$0xf] %v934
  %983 = vst [vmem:[#allocation2 + $0x10] sm:$0xf] %v935
  %984 = vst [vmem:[#allocation2 + $0x14] sm:$0xf] %v936
  %985 = vst [vmem:[#allocation2 + $0x18] sm:$0xf] %v937
  %986 = vst [vmem:[#allocation2 + $0x1c] sm:$0xf] %v938
  %987 = vst [vmem:[#allocation2 + $0x20] sm:$0xf] %v939
  %988 = vst [vmem:[#allocation2 + $0x24] sm:$0xf] %v940
  %989 = vst [vmem:[#allocation2 + $0x28] sm:$0xf] %v941
  %990 = vst [vmem:[#allocation2 + $0x2c] sm:$0xf] %v942
  %991 = vst [vmem:[#allocation2 + $0x30] sm:$0xf] %v943
  %992 = vst [vmem:[#allocation2 + $0x34] sm:$0xf] %v944
  %993 = vst [vmem:[#allocation2 + $0x38] sm:$0xf] %v945
  %994 = vst [vmem:[#allocation2 + $0x3c] sm:$0xf] %v946
  %995 = vst [vmem:[#allocation2 + $0x40] sm:$0xf] %v947
  %996 = vst [vmem:[#allocation2 + $0x44] sm:$0xf] %v948
  %997 = vst [vmem:[#allocation2 + $0x48] sm:$0xf] %v949
  %998 = vst [vmem:[#allocation2 + $0x4c] sm:$0xf] %v950
  %999 = vst [vmem:[#allocation2 + $0x50] sm:$0xf] %v951
  %1000 = vst [vmem:[#allocation2 + $0x54] sm:$0xf] %v952
  %1001 = vst [vmem:[#allocation2 + $0x58] sm:$0xf] %v953
  %1002 = vst [vmem:[#allocation2 + $0x5c] sm:$0xf] %v954
  %v1003 = vld [vmem:[#allocation2] sm:$0xf]
  %v1004 = vld [vmem:[#allocation2 + $0x4] sm:$0xf]
  %v1005 = vld [vmem:[#allocation2 + $0x8] sm:$0xf]
  %v1006 = vld [vmem:[#allocation2 + $0xc] sm:$0xf]
  %v1007 = vld [vmem:[#allocation2 + $0x10] sm:$0xf]
  %v1008 = vld [vmem:[#allocation2 + $0x14] sm:$0xf]
  %v1009 = vld [vmem:[#allocation2 + $0x18] sm:$0xf]
  %v1010 = vld [vmem:[#allocation2 + $0x1c] sm:$0xf]
  %v1011 = vld [vmem:[#allocation2 + $0x20] sm:$0xf]
  %v1012 = vld [vmem:[#allocation2 + $0x24] sm:$0xf]
  %v1013 = vld [vmem:[#allocation2 + $0x28] sm:$0xf]
  %v1014 = vld [vmem:[#allocation2 + $0x2c] sm:$0xf]
  %v1015 = vld [vmem:[#allocation2 + $0x30] sm:$0xf]
  %v1016 = vld [vmem:[#allocation2 + $0x34] sm:$0xf]
  %v1017 = vld [vmem:[#allocation2 + $0x38] sm:$0xf]
  %v1018 = vld [vmem:[#allocation2 + $0x3c] sm:$0xf]
  %v1019 = vld [vmem:[%s3] sm:$0xff]
  %v1020 = vld [vmem:[%s3 + $0x8] sm:$0xff]
  %v1021 = vld [vmem:[%s3 + $0x10] sm:$0xff]
  %v1022 = vld [vmem:[%s3 + $0x18] sm:$0xff]
  %v1023 = vld [vmem:[%s3 + $0x20] sm:$0xff]
  %v1024 = vld [vmem:[%s3 + $0x28] sm:$0xff]
  %v1025 = vld [vmem:[%s3 + $0x30] sm:$0xff]
  %v1026 = vld [vmem:[%s3 + $0x38] sm:$0xff]
  %v1027 = vld [vmem:[%s3 + $0x40] sm:$0xff]
  %v1028 = vld [vmem:[%s3 + $0x48] sm:$0xff]
  %v1029 = vld [vmem:[%s3 + $0x50] sm:$0xff]
  %v1030 = vld [vmem:[%s3 + $0x58] sm:$0xff]
  %v1031 = vld [vmem:[%s3 + $0x60] sm:$0xff]
  %v1032 = vld [vmem:[%s3 + $0x68] sm:$0xff]
  %v1033 = vld [vmem:[%s3 + $0x70] sm:$0xff]
  %v1034 = vld [vmem:[%s3 + $0x78] sm:$0xff]
  %v1035 = vld [vmem:[#allocation2 + $0x40] sm:$0xf]
  %v1036 = vld [vmem:[#allocation2 + $0x44] sm:$0xf]
  %s1037 = scalar_lea.vmem %s3, 128
  %v1038 = vld [vmem:[%s1037] sm:$0xff]
  %v1039 = vld [vmem:[%s1037 + $0x8] sm:$0xff]
  %v1040 = vld [vmem:[%s1037 + $0x10] sm:$0xff]
  %v1041 = vld [vmem:[%s1037 + $0x18] sm:$0xff]
  %v1042 = vld [vmem:[%s1037 + $0x20] sm:$0xff]
  %v1043 = vld [vmem:[%s1037 + $0x28] sm:$0xff]
  %v1044 = vld [vmem:[%s1037 + $0x30] sm:$0xff]
  %v1045 = vld [vmem:[%s1037 + $0x38] sm:$0xff]
  %v1046 = vld [vmem:[%s1037 + $0x40] sm:$0xff]
  %v1047 = vld [vmem:[%s1037 + $0x48] sm:$0xff]
  %v1048 = vld [vmem:[%s1037 + $0x50] sm:$0xff]
  %v1049 = vld [vmem:[%s1037 + $0x58] sm:$0xff]
  %v1050 = vld [vmem:[%s1037 + $0x60] sm:$0xff]
  %v1051 = vld [vmem:[%s1037 + $0x68] sm:$0xff]
  %v1052 = vld [vmem:[%s1037 + $0x70] sm:$0xff]
  %v1053 = vld [vmem:[%s1037 + $0x78] sm:$0xff]
  %v1070 = vunpack.c.l.b16 %v1005
  %v1071 = vunpack.c.l.b16 %v1006
  %v1072 = vunpack.c.l.b16 %v1007
  %v1073 = vunpack.c.l.b16 %v1008
  %v1074 = vunpack.c.l.b16 %v1009
  %v1075 = vunpack.c.l.b16 %v1010
  %v1076 = vunpack.c.l.b16 %v1011
  %v1077 = vunpack.c.l.b16 %v1012
  %v1078 = vunpack.c.l.b16 %v1013
  %v1079 = vunpack.c.l.b16 %v1014
  %v1080 = vunpack.c.l.b16 %v1015
  %v1081 = vunpack.c.l.b16 %v1016
  %v1082 = vunpack.c.l.b16 %v1017
  %v1083 = vunpack.c.l.b16 %v1018
  %v1084 = vunpack.c.l.b16 %v1035
  %v1085 = vunpack.c.l.b16 %v1036
  %v1086 = vpack.c.b16 %v1071, %v1070
  %v1087 = vpack.c.b16 %v1073, %v1072
  %v1088 = vpack.c.b16 %v1075, %v1074
  %v1089 = vpack.c.b16 %v1077, %v1076
  %v1090 = vpack.c.b16 %v1079, %v1078
  %v1091 = vpack.c.b16 %v1081, %v1080
  %v1092 = vpack.c.b16 %v1083, %v1082
  %v1093 = vpack.c.b16 %v1085, %v1084
  %v1118 = vunpack.c.l.b16 %v1038
  %v1119 = vunpack.c.h.b16 %v1038
  %v1120 = vunpack.c.l.b16 %v1039
  %v1121 = vunpack.c.h.b16 %v1039
  %v1122 = vunpack.c.l.b16 %v1040
  %v1123 = vunpack.c.h.b16 %v1040
  %v1124 = vunpack.c.l.b16 %v1041
  %v1125 = vunpack.c.h.b16 %v1041
  %v1126 = vunpack.c.l.b16 %v1042
  %v1127 = vunpack.c.h.b16 %v1042
  %v1128 = vunpack.c.l.b16 %v1043
  %v1129 = vunpack.c.h.b16 %v1043
  %v1130 = vunpack.c.l.b16 %v1044
  %v1131 = vunpack.c.h.b16 %v1044
  %v1132 = vunpack.c.l.b16 %v1045
  %v1133 = vunpack.c.h.b16 %v1045
  %v1134 = vunpack.c.l.b16 %v1046
  %v1135 = vunpack.c.h.b16 %v1046
  %v1136 = vunpack.c.l.b16 %v1047
  %v1137 = vunpack.c.h.b16 %v1047
  %v1138 = vunpack.c.l.b16 %v1048
  %v1139 = vunpack.c.h.b16 %v1048
  %v1140 = vunpack.c.l.b16 %v1049
  %v1141 = vunpack.c.h.b16 %v1049
  %v1142 = vunpack.c.l.b16 %v1050
  %v1143 = vunpack.c.h.b16 %v1050
  %v1144 = vunpack.c.l.b16 %v1051
  %v1145 = vunpack.c.h.b16 %v1051
  %v1146 = vunpack.c.l.b16 %v1052
  %v1147 = vunpack.c.h.b16 %v1052
  %v1148 = vunpack.c.l.b16 %v1053
  %v1149 = vunpack.c.h.b16 %v1053
  %v1150 = vpack.c.b16 %v1120, %v1118
  %v1151 = vpack.c.b16 %v1121, %v1119
  %v1152 = vpack.c.b16 %v1124, %v1122
  %v1153 = vpack.c.b16 %v1125, %v1123
  %v1154 = vpack.c.b16 %v1128, %v1126
  %v1155 = vpack.c.b16 %v1129, %v1127
  %v1156 = vpack.c.b16 %v1132, %v1130
  %v1157 = vpack.c.b16 %v1133, %v1131
  %v1158 = vpack.c.b16 %v1136, %v1134
  %v1159 = vpack.c.b16 %v1137, %v1135
  %v1160 = vpack.c.b16 %v1140, %v1138
  %v1161 = vpack.c.b16 %v1141, %v1139
  %v1162 = vpack.c.b16 %v1144, %v1142
  %v1163 = vpack.c.b16 %v1145, %v1143
  %v1164 = vpack.c.b16 %v1148, %v1146
  %v1165 = vpack.c.b16 %v1149, %v1147
  %1182 = vmatprep.subr.bf16.mxu0 %v1165
  %1183 = vmatpush1.bf16.msra.mxu0 %v1164
  %1184 = vmatprep.subr.bf16.mxu0 %v1163
  %1185 = vmatpush1.bf16.msra.mxu0 %v1162
  %1186 = vmatprep.subr.bf16.mxu0 %v1161
  %1187 = vmatpush1.bf16.msra.mxu0 %v1160
  %1188 = vmatprep.subr.bf16.mxu0 %v1159
  %1189 = vmatpush1.bf16.msra.mxu0 %v1158
  %1190 = vmatprep.subr.bf16.mxu0 %v1157
  %1191 = vmatpush1.bf16.msra.mxu0 %v1156
  %1192 = vmatprep.subr.bf16.mxu0 %v1155
  %1193 = vmatpush1.bf16.msra.mxu0 %v1154
  %1194 = vmatprep.subr.bf16.mxu0 %v1153
  %1195 = vmatpush1.bf16.msra.mxu0 %v1152
  %1196 = vmatprep.subr.bf16.mxu0 %v1151
  %1197 = vmatpush1.bf16.msra.mxu0 %v1150
  %1198 = vmatprep.subr.bf16.mxu0 0
  %1199 = vmatpush2.bf16.msra.mxu0 0
  %1200 = vmatprep.subr.bf16.mxu0 0
  %1201 = vmatpush2.bf16.msra.mxu0 0
  %1202 = vmatprep.subr.bf16.mxu0 0
  %1203 = vmatpush2.bf16.msra.mxu0 0
  %1204 = vmatprep.subr.bf16.mxu0 0
  %1205 = vmatpush2.bf16.msra.mxu0 0
  %1206 = vmatprep.subr.bf16.mxu0 0
  %1207 = vmatpush2.bf16.msra.mxu0 0
  %1208 = vmatprep.subr.bf16.mxu0 0
  %1209 = vmatpush2.bf16.msra.mxu0 0
  %1210 = vmatprep.subr.bf16.mxu0 0
  %1211 = vmatpush2.bf16.msra.mxu0 0
  %1212 = vmatprep.subr.bf16.mxu0 0
  %1213 = vmatpush2.bf16.msra.mxu0 0
  %1214 = vmatprep.mubr.bf16.mxu0 0
  %1215 = vmatmul.mubr.bf16.gmra.mxu0 %v1086
  %v1216 = vpop.f32.mrf.mxu0
  %v1217 = vadd.f32 0.0, %v1216
  %v1218 = vpop.f32.mrf.mxu0
  %v1219 = vadd.f32 0.0, %v1218
  %v1220 = vpop.f32.mrf.mxu0
  %v1221 = vadd.f32 0.0, %v1220
  %v1222 = vpop.f32.mrf.mxu0
  %v1223 = vadd.f32 0.0, %v1222
  %1224 = vmatprep.mubr.bf16.mxu0 0
  %1225 = vmatmul.mubr.bf16.gmra.mxu0 %v1087
  %v1226 = vpop.f32.mrf.mxu0
  %v1227 = vadd.f32 0.0, %v1226
  %v1228 = vpop.f32.mrf.mxu0
  %v1229 = vadd.f32 0.0, %v1228
  %v1230 = vpop.f32.mrf.mxu0
  %v1231 = vadd.f32 0.0, %v1230
  %v1232 = vpop.f32.mrf.mxu0
  %v1233 = vadd.f32 0.0, %v1232
  %1234 = vmatprep.mubr.bf16.mxu0 0
  %1235 = vmatmul.mubr.bf16.gmra.mxu0 %v1088
  %v1236 = vpop.f32.mrf.mxu0
  %v1237 = vadd.f32 0.0, %v1236
  %v1238 = vpop.f32.mrf.mxu0
  %v1239 = vadd.f32 0.0, %v1238
  %v1240 = vpop.f32.mrf.mxu0
  %v1241 = vadd.f32 0.0, %v1240
  %v1242 = vpop.f32.mrf.mxu0
  %v1243 = vadd.f32 0.0, %v1242
  %1244 = vmatprep.mubr.bf16.mxu0 0
  %1245 = vmatmul.mubr.bf16.gmra.mxu0 %v1089
  %v1246 = vpop.f32.mrf.mxu0
  %v1247 = vadd.f32 0.0, %v1246
  %v1248 = vpop.f32.mrf.mxu0
  %v1249 = vadd.f32 0.0, %v1248
  %v1250 = vpop.f32.mrf.mxu0
  %v1251 = vadd.f32 0.0, %v1250
  %v1252 = vpop.f32.mrf.mxu0
  %v1253 = vadd.f32 0.0, %v1252
  %1254 = vmatprep.mubr.bf16.mxu0 0
  %1255 = vmatmul.mubr.bf16.gmra.mxu0 %v1090
  %v1256 = vpop.f32.mrf.mxu0
  %v1257 = vadd.f32 0.0, %v1256
  %v1258 = vpop.f32.mrf.mxu0
  %v1259 = vadd.f32 0.0, %v1258
  %v1260 = vpop.f32.mrf.mxu0
  %v1261 = vadd.f32 0.0, %v1260
  %v1262 = vpop.f32.mrf.mxu0
  %v1263 = vadd.f32 0.0, %v1262
  %1264 = vmatprep.mubr.bf16.mxu0 0
  %1265 = vmatmul.mubr.bf16.gmra.mxu0 %v1091
  %v1266 = vpop.f32.mrf.mxu0
  %v1267 = vadd.f32 0.0, %v1266
  %v1268 = vpop.f32.mrf.mxu0
  %v1269 = vadd.f32 0.0, %v1268
  %v1270 = vpop.f32.mrf.mxu0
  %v1271 = vadd.f32 0.0, %v1270
  %v1272 = vpop.f32.mrf.mxu0
  %v1273 = vadd.f32 0.0, %v1272
  %1274 = vmatprep.mubr.bf16.mxu0 0
  %1275 = vmatmul.mubr.bf16.gmra.mxu0 %v1092
  %v1276 = vpop.f32.mrf.mxu0
  %v1277 = vadd.f32 0.0, %v1276
  %v1278 = vpop.f32.mrf.mxu0
  %v1279 = vadd.f32 0.0, %v1278
  %v1280 = vpop.f32.mrf.mxu0
  %v1281 = vadd.f32 0.0, %v1280
  %v1282 = vpop.f32.mrf.mxu0
  %v1283 = vadd.f32 0.0, %v1282
  %1284 = vmatprep.mubr.bf16.mxu0 0
  %1285 = vmatmul.mubr.bf16.gmra.mxu0 %v1093
  %v1286 = vpop.f32.mrf.mxu0
  %v1287 = vadd.f32 0.0, %v1286
  %v1288 = vpop.f32.mrf.mxu0
  %v1289 = vadd.f32 0.0, %v1288
  %v1290 = vpop.f32.mrf.mxu0
  %v1291 = vadd.f32 0.0, %v1290
  %v1292 = vpop.f32.mrf.mxu0
  %v1293 = vadd.f32 0.0, %v1292
  %1294 = vdwg.mxu0
  %v1297 = vunpack.c.l.b16 %v1003
  %v1298 = vunpack.c.l.b16 %v1004
  %v1299 = vpack.c.b16 %v1298, %v1297
  %v1317 = vunpack.c.l.b16 %v1019
  %v1318 = vunpack.c.h.b16 %v1019
  %v1319 = vunpack.c.l.b16 %v1020
  %v1320 = vunpack.c.h.b16 %v1020
  %v1321 = vunpack.c.l.b16 %v1021
  %v1322 = vunpack.c.h.b16 %v1021
  %v1323 = vunpack.c.l.b16 %v1022
  %v1324 = vunpack.c.h.b16 %v1022
  %v1325 = vunpack.c.l.b16 %v1023
  %v1326 = vunpack.c.h.b16 %v1023
  %v1327 = vunpack.c.l.b16 %v1024
  %v1328 = vunpack.c.h.b16 %v1024
  %v1329 = vunpack.c.l.b16 %v1025
  %v1330 = vunpack.c.h.b16 %v1025
  %v1331 = vunpack.c.l.b16 %v1026
  %v1332 = vunpack.c.h.b16 %v1026
  %v1333 = vunpack.c.l.b16 %v1027
  %v1334 = vunpack.c.h.b16 %v1027
  %v1335 = vunpack.c.l.b16 %v1028
  %v1336 = vunpack.c.h.b16 %v1028
  %v1337 = vunpack.c.l.b16 %v1029
  %v1338 = vunpack.c.h.b16 %v1029
  %v1339 = vunpack.c.l.b16 %v1030
  %v1340 = vunpack.c.h.b16 %v1030
  %v1341 = vunpack.c.l.b16 %v1031
  %v1342 = vunpack.c.h.b16 %v1031
  %v1343 = vunpack.c.l.b16 %v1032
  %v1344 = vunpack.c.h.b16 %v1032
  %v1345 = vunpack.c.l.b16 %v1033
  %v1346 = vunpack.c.h.b16 %v1033
  %v1347 = vunpack.c.l.b16 %v1034
  %v1348 = vunpack.c.h.b16 %v1034
  %v1349 = vpack.c.b16 %v1319, %v1317
  %v1350 = vpack.c.b16 %v1320, %v1318
  %v1351 = vpack.c.b16 %v1323, %v1321
  %v1352 = vpack.c.b16 %v1324, %v1322
  %v1353 = vpack.c.b16 %v1327, %v1325
  %v1354 = vpack.c.b16 %v1328, %v1326
  %v1355 = vpack.c.b16 %v1331, %v1329
  %v1356 = vpack.c.b16 %v1332, %v1330
  %v1357 = vpack.c.b16 %v1335, %v1333
  %v1358 = vpack.c.b16 %v1336, %v1334
  %v1359 = vpack.c.b16 %v1339, %v1337
  %v1360 = vpack.c.b16 %v1340, %v1338
  %v1361 = vpack.c.b16 %v1343, %v1341
  %v1362 = vpack.c.b16 %v1344, %v1342
  %v1363 = vpack.c.b16 %v1347, %v1345
  %v1364 = vpack.c.b16 %v1348, %v1346
  %1381 = vmatprep.subr.bf16.mxu0 %v1364
  %1382 = vmatpush1.bf16.msra.mxu0 %v1363
  %1383 = vmatprep.subr.bf16.mxu0 %v1362
  %1384 = vmatpush1.bf16.msra.mxu0 %v1361
  %1385 = vmatprep.subr.bf16.mxu0 %v1360
  %1386 = vmatpush1.bf16.msra.mxu0 %v1359
  %1387 = vmatprep.subr.bf16.mxu0 %v1358
  %1388 = vmatpush1.bf16.msra.mxu0 %v1357
  %1389 = vmatprep.subr.bf16.mxu0 %v1356
  %1390 = vmatpush1.bf16.msra.mxu0 %v1355
  %1391 = vmatprep.subr.bf16.mxu0 %v1354
  %1392 = vmatpush1.bf16.msra.mxu0 %v1353
  %1393 = vmatprep.subr.bf16.mxu0 %v1352
  %1394 = vmatpush1.bf16.msra.mxu0 %v1351
  %1395 = vmatprep.subr.bf16.mxu0 %v1350
  %1396 = vmatpush1.bf16.msra.mxu0 %v1349
  %1397 = vmatprep.subr.bf16.mxu0 0
  %1398 = vmatpush2.bf16.msra.mxu0 0
  %1399 = vmatprep.subr.bf16.mxu0 0
  %1400 = vmatpush2.bf16.msra.mxu0 0
  %1401 = vmatprep.subr.bf16.mxu0 0
  %1402 = vmatpush2.bf16.msra.mxu0 0
  %1403 = vmatprep.subr.bf16.mxu0 0
  %1404 = vmatpush2.bf16.msra.mxu0 0
  %1405 = vmatprep.subr.bf16.mxu0 0
  %1406 = vmatpush2.bf16.msra.mxu0 0
  %1407 = vmatprep.subr.bf16.mxu0 0
  %1408 = vmatpush2.bf16.msra.mxu0 0
  %1409 = vmatprep.subr.bf16.mxu0 0
  %1410 = vmatpush2.bf16.msra.mxu0 0
  %1411 = vmatprep.subr.bf16.mxu0 0
  %1412 = vmatpush2.bf16.msra.mxu0 0
  %1413 = vmatprep.mubr.bf16.mxu0 0
  %1414 = vmatmul.mubr.bf16.gmra.mxu0 %v1299
  %v1415 = vpop.f32.mrf.mxu0
  %v1416 = vadd.f32 %v1217, %v1415
  %v1417 = vpop.f32.mrf.mxu0
  %v1418 = vadd.f32 %v1219, %v1417
  %v1419 = vpop.f32.mrf.mxu0
  %v1420 = vadd.f32 %v1221, %v1419
  %v1421 = vpop.f32.mrf.mxu0
  %v1422 = vadd.f32 %v1223, %v1421
  %1423 = vmatprep.mubr.bf16.mxu0 0
  %1424 = vmatmul.mubr.bf16.gmra.mxu0 %v1086
  %v1425 = vpop.f32.mrf.mxu0
  %v1426 = vadd.f32 %v1227, %v1425
  %v1427 = vpop.f32.mrf.mxu0
  %v1428 = vadd.f32 %v1229, %v1427
  %v1429 = vpop.f32.mrf.mxu0
  %v1430 = vadd.f32 %v1231, %v1429
  %v1431 = vpop.f32.mrf.mxu0
  %v1432 = vadd.f32 %v1233, %v1431
  %1433 = vmatprep.mubr.bf16.mxu0 0
  %1434 = vmatmul.mubr.bf16.gmra.mxu0 %v1087
  %v1435 = vpop.f32.mrf.mxu0
  %v1436 = vadd.f32 %v1237, %v1435
  %v1437 = vpop.f32.mrf.mxu0
  %v1438 = vadd.f32 %v1239, %v1437
  %v1439 = vpop.f32.mrf.mxu0
  %v1440 = vadd.f32 %v1241, %v1439
  %v1441 = vpop.f32.mrf.mxu0
  %v1442 = vadd.f32 %v1243, %v1441
  %1443 = vmatprep.mubr.bf16.mxu0 0
  %1444 = vmatmul.mubr.bf16.gmra.mxu0 %v1088
  %v1445 = vpop.f32.mrf.mxu0
  %v1446 = vadd.f32 %v1247, %v1445
  %v1447 = vpop.f32.mrf.mxu0
  %v1448 = vadd.f32 %v1249, %v1447
  %v1449 = vpop.f32.mrf.mxu0
  %v1450 = vadd.f32 %v1251, %v1449
  %v1451 = vpop.f32.mrf.mxu0
  %v1452 = vadd.f32 %v1253, %v1451
  %1453 = vmatprep.mubr.bf16.mxu0 0
  %1454 = vmatmul.mubr.bf16.gmra.mxu0 %v1089
  %v1455 = vpop.f32.mrf.mxu0
  %v1456 = vadd.f32 %v1257, %v1455
  %v1457 = vpop.f32.mrf.mxu0
  %v1458 = vadd.f32 %v1259, %v1457
  %v1459 = vpop.f32.mrf.mxu0
  %v1460 = vadd.f32 %v1261, %v1459
  %v1461 = vpop.f32.mrf.mxu0
  %v1462 = vadd.f32 %v1263, %v1461
  %1463 = vmatprep.mubr.bf16.mxu0 0
  %1464 = vmatmul.mubr.bf16.gmra.mxu0 %v1090
  %v1465 = vpop.f32.mrf.mxu0
  %v1466 = vadd.f32 %v1267, %v1465
  %v1467 = vpop.f32.mrf.mxu0
  %v1468 = vadd.f32 %v1269, %v1467
  %v1469 = vpop.f32.mrf.mxu0
  %v1470 = vadd.f32 %v1271, %v1469
  %v1471 = vpop.f32.mrf.mxu0
  %v1472 = vadd.f32 %v1273, %v1471
  %1473 = vmatprep.mubr.bf16.mxu0 0
  %1474 = vmatmul.mubr.bf16.gmra.mxu0 %v1091
  %v1475 = vpop.f32.mrf.mxu0
  %v1476 = vadd.f32 %v1277, %v1475
  %v1477 = vpop.f32.mrf.mxu0
  %v1478 = vadd.f32 %v1279, %v1477
  %v1479 = vpop.f32.mrf.mxu0
  %v1480 = vadd.f32 %v1281, %v1479
  %v1481 = vpop.f32.mrf.mxu0
  %v1482 = vadd.f32 %v1283, %v1481
  %1483 = vmatprep.mubr.bf16.mxu0 0
  %1484 = vmatmul.mubr.bf16.gmra.mxu0 %v1092
  %v1485 = vpop.f32.mrf.mxu0
  %v1486 = vadd.f32 %v1287, %v1485
  %v1487 = vpop.f32.mrf.mxu0
  %v1488 = vadd.f32 %v1289, %v1487
  %v1489 = vpop.f32.mrf.mxu0
  %v1490 = vadd.f32 %v1291, %v1489
  %v1491 = vpop.f32.mrf.mxu0
  %v1492 = vadd.f32 %v1293, %v1491
  %1493 = vdwg.mxu0
  %v1494 = vld [vmem:[#allocation2 + $0x10] sm:$0xf]
  %v1495 = vld [vmem:[#allocation2 + $0x14] sm:$0xf]
  %v1496 = vld [vmem:[#allocation2 + $0x18] sm:$0xf]
  %v1497 = vld [vmem:[#allocation2 + $0x1c] sm:$0xf]
  %v1498 = vld [vmem:[#allocation2 + $0x20] sm:$0xf]
  %v1499 = vld [vmem:[#allocation2 + $0x24] sm:$0xf]
  %v1500 = vld [vmem:[#allocation2 + $0x28] sm:$0xf]
  %v1501 = vld [vmem:[#allocation2 + $0x2c] sm:$0xf]
  %v1502 = vld [vmem:[#allocation2 + $0x30] sm:$0xf]
  %v1503 = vld [vmem:[#allocation2 + $0x34] sm:$0xf]
  %v1504 = vld [vmem:[#allocation2 + $0x38] sm:$0xf]
  %v1505 = vld [vmem:[#allocation2 + $0x3c] sm:$0xf]
  %v1506 = vld [vmem:[#allocation2 + $0x40] sm:$0xf]
  %v1507 = vld [vmem:[#allocation2 + $0x44] sm:$0xf]
  %v1508 = vld [vmem:[#allocation2 + $0x48] sm:$0xf]
  %v1509 = vld [vmem:[#allocation2 + $0x4c] sm:$0xf]
  %s1510 = scalar_lea.vmem %s3, 256
  %v1511 = vld [vmem:[%s1510] sm:$0xff]
  %v1512 = vld [vmem:[%s1510 + $0x8] sm:$0xff]
  %v1513 = vld [vmem:[%s1510 + $0x10] sm:$0xff]
  %v1514 = vld [vmem:[%s1510 + $0x18] sm:$0xff]
  %v1515 = vld [vmem:[%s1510 + $0x20] sm:$0xff]
  %v1516 = vld [vmem:[%s1510 + $0x28] sm:$0xff]
  %v1517 = vld [vmem:[%s1510 + $0x30] sm:$0xff]
  %v1518 = vld [vmem:[%s1510 + $0x38] sm:$0xff]
  %v1519 = vld [vmem:[%s1510 + $0x40] sm:$0xff]
  %v1520 = vld [vmem:[%s1510 + $0x48] sm:$0xff]
  %v1521 = vld [vmem:[%s1510 + $0x50] sm:$0xff]
  %v1522 = vld [vmem:[%s1510 + $0x58] sm:$0xff]
  %v1523 = vld [vmem:[%s1510 + $0x60] sm:$0xff]
  %v1524 = vld [vmem:[%s1510 + $0x68] sm:$0xff]
  %v1525 = vld [vmem:[%s1510 + $0x70] sm:$0xff]
  %v1526 = vld [vmem:[%s1510 + $0x78] sm:$0xff]
  %v1543 = vunpack.c.l.b16 %v1494
  %v1544 = vunpack.c.l.b16 %v1495
  %v1545 = vunpack.c.l.b16 %v1496
  %v1546 = vunpack.c.l.b16 %v1497
  %v1547 = vunpack.c.l.b16 %v1498
  %v1548 = vunpack.c.l.b16 %v1499
  %v1549 = vunpack.c.l.b16 %v1500
  %v1550 = vunpack.c.l.b16 %v1501
  %v1551 = vunpack.c.l.b16 %v1502
  %v1552 = vunpack.c.l.b16 %v1503
  %v1553 = vunpack.c.l.b16 %v1504
  %v1554 = vunpack.c.l.b16 %v1505
  %v1555 = vunpack.c.l.b16 %v1506
  %v1556 = vunpack.c.l.b16 %v1507
  %v1557 = vunpack.c.l.b16 %v1508
  %v1558 = vunpack.c.l.b16 %v1509
  %v1559 = vpack.c.b16 %v1544, %v1543
  %v1560 = vpack.c.b16 %v1546, %v1545
  %v1561 = vpack.c.b16 %v1548, %v1547
  %v1562 = vpack.c.b16 %v1550, %v1549
  %v1563 = vpack.c.b16 %v1552, %v1551
  %v1564 = vpack.c.b16 %v1554, %v1553
  %v1565 = vpack.c.b16 %v1556, %v1555
  %v1566 = vpack.c.b16 %v1558, %v1557
  %v1591 = vunpack.c.l.b16 %v1511
  %v1592 = vunpack.c.h.b16 %v1511
  %v1593 = vunpack.c.l.b16 %v1512
  %v1594 = vunpack.c.h.b16 %v1512
  %v1595 = vunpack.c.l.b16 %v1513
  %v1596 = vunpack.c.h.b16 %v1513
  %v1597 = vunpack.c.l.b16 %v1514
  %v1598 = vunpack.c.h.b16 %v1514
  %v1599 = vunpack.c.l.b16 %v1515
  %v1600 = vunpack.c.h.b16 %v1515
  %v1601 = vunpack.c.l.b16 %v1516
  %v1602 = vunpack.c.h.b16 %v1516
  %v1603 = vunpack.c.l.b16 %v1517
  %v1604 = vunpack.c.h.b16 %v1517
  %v1605 = vunpack.c.l.b16 %v1518
  %v1606 = vunpack.c.h.b16 %v1518
  %v1607 = vunpack.c.l.b16 %v1519
  %v1608 = vunpack.c.h.b16 %v1519
  %v1609 = vunpack.c.l.b16 %v1520
  %v1610 = vunpack.c.h.b16 %v1520
  %v1611 = vunpack.c.l.b16 %v1521
  %v1612 = vunpack.c.h.b16 %v1521
  %v1613 = vunpack.c.l.b16 %v1522
  %v1614 = vunpack.c.h.b16 %v1522
  %v1615 = vunpack.c.l.b16 %v1523
  %v1616 = vunpack.c.h.b16 %v1523
  %v1617 = vunpack.c.l.b16 %v1524
  %v1618 = vunpack.c.h.b16 %v1524
  %v1619 = vunpack.c.l.b16 %v1525
  %v1620 = vunpack.c.h.b16 %v1525
  %v1621 = vunpack.c.l.b16 %v1526
  %v1622 = vunpack.c.h.b16 %v1526
  %v1623 = vpack.c.b16 %v1593, %v1591
  %v1624 = vpack.c.b16 %v1594, %v1592
  %v1625 = vpack.c.b16 %v1597, %v1595
  %v1626 = vpack.c.b16 %v1598, %v1596
  %v1627 = vpack.c.b16 %v1601, %v1599
  %v1628 = vpack.c.b16 %v1602, %v1600
  %v1629 = vpack.c.b16 %v1605, %v1603
  %v1630 = vpack.c.b16 %v1606, %v1604
  %v1631 = vpack.c.b16 %v1609, %v1607
  %v1632 = vpack.c.b16 %v1610, %v1608
  %v1633 = vpack.c.b16 %v1613, %v1611
  %v1634 = vpack.c.b16 %v1614, %v1612
  %v1635 = vpack.c.b16 %v1617, %v1615
  %v1636 = vpack.c.b16 %v1618, %v1616
  %v1637 = vpack.c.b16 %v1621, %v1619
  %v1638 = vpack.c.b16 %v1622, %v1620
  %1655 = vmatprep.subr.bf16.mxu0 %v1638
  %1656 = vmatpush1.bf16.msra.mxu0 %v1637
  %1657 = vmatprep.subr.bf16.mxu0 %v1636
  %1658 = vmatpush1.bf16.msra.mxu0 %v1635
  %1659 = vmatprep.subr.bf16.mxu0 %v1634
  %1660 = vmatpush1.bf16.msra.mxu0 %v1633
  %1661 = vmatprep.subr.bf16.mxu0 %v1632
  %1662 = vmatpush1.bf16.msra.mxu0 %v1631
  %1663 = vmatprep.subr.bf16.mxu0 %v1630
  %1664 = vmatpush1.bf16.msra.mxu0 %v1629
  %1665 = vmatprep.subr.bf16.mxu0 %v1628
  %1666 = vmatpush1.bf16.msra.mxu0 %v1627
  %1667 = vmatprep.subr.bf16.mxu0 %v1626
  %1668 = vmatpush1.bf16.msra.mxu0 %v1625
  %1669 = vmatprep.subr.bf16.mxu0 %v1624
  %1670 = vmatpush1.bf16.msra.mxu0 %v1623
  %1671 = vmatprep.subr.bf16.mxu0 0
  %1672 = vmatpush2.bf16.msra.mxu0 0
  %1673 = vmatprep.subr.bf16.mxu0 0
  %1674 = vmatpush2.bf16.msra.mxu0 0
  %1675 = vmatprep.subr.bf16.mxu0 0
  %1676 = vmatpush2.bf16.msra.mxu0 0
  %1677 = vmatprep.subr.bf16.mxu0 0
  %1678 = vmatpush2.bf16.msra.mxu0 0
  %1679 = vmatprep.subr.bf16.mxu0 0
  %1680 = vmatpush2.bf16.msra.mxu0 0
  %1681 = vmatprep.subr.bf16.mxu0 0
  %1682 = vmatpush2.bf16.msra.mxu0 0
  %1683 = vmatprep.subr.bf16.mxu0 0
  %1684 = vmatpush2.bf16.msra.mxu0 0
  %1685 = vmatprep.subr.bf16.mxu0 0
  %1686 = vmatpush2.bf16.msra.mxu0 0
  %1687 = vmatprep.mubr.bf16.mxu0 0
  %1688 = vmatmul.mubr.bf16.gmra.mxu0 %v1559
  %v1689 = vpop.f32.mrf.mxu0
  %v1690 = vadd.f32 0.0, %v1689
  %v1691 = vpop.f32.mrf.mxu0
  %v1692 = vadd.f32 0.0, %v1691
  %v1693 = vpop.f32.mrf.mxu0
  %v1694 = vadd.f32 0.0, %v1693
  %v1695 = vpop.f32.mrf.mxu0
  %v1696 = vadd.f32 0.0, %v1695
  %1697 = vmatprep.mubr.bf16.mxu0 0
  %1698 = vmatmul.mubr.bf16.gmra.mxu0 %v1560
  %v1699 = vpop.f32.mrf.mxu0
  %v1700 = vadd.f32 0.0, %v1699
  %v1701 = vpop.f32.mrf.mxu0
  %v1702 = vadd.f32 0.0, %v1701
  %v1703 = vpop.f32.mrf.mxu0
  %v1704 = vadd.f32 0.0, %v1703
  %v1705 = vpop.f32.mrf.mxu0
  %v1706 = vadd.f32 0.0, %v1705
  %1707 = vmatprep.mubr.bf16.mxu0 0
  %1708 = vmatmul.mubr.bf16.gmra.mxu0 %v1561
  %v1709 = vpop.f32.mrf.mxu0
  %v1710 = vadd.f32 0.0, %v1709
  %v1711 = vpop.f32.mrf.mxu0
  %v1712 = vadd.f32 0.0, %v1711
  %v1713 = vpop.f32.mrf.mxu0
  %v1714 = vadd.f32 0.0, %v1713
  %v1715 = vpop.f32.mrf.mxu0
  %v1716 = vadd.f32 0.0, %v1715
  %1717 = vmatprep.mubr.bf16.mxu0 0
  %1718 = vmatmul.mubr.bf16.gmra.mxu0 %v1562
  %v1719 = vpop.f32.mrf.mxu0
  %v1720 = vadd.f32 0.0, %v1719
  %v1721 = vpop.f32.mrf.mxu0
  %v1722 = vadd.f32 0.0, %v1721
  %v1723 = vpop.f32.mrf.mxu0
  %v1724 = vadd.f32 0.0, %v1723
  %v1725 = vpop.f32.mrf.mxu0
  %v1726 = vadd.f32 0.0, %v1725
  %1727 = vmatprep.mubr.bf16.mxu0 0
  %1728 = vmatmul.mubr.bf16.gmra.mxu0 %v1563
  %v1729 = vpop.f32.mrf.mxu0
  %v1730 = vadd.f32 0.0, %v1729
  %v1731 = vpop.f32.mrf.mxu0
  %v1732 = vadd.f32 0.0, %v1731
  %v1733 = vpop.f32.mrf.mxu0
  %v1734 = vadd.f32 0.0, %v1733
  %v1735 = vpop.f32.mrf.mxu0
  %v1736 = vadd.f32 0.0, %v1735
  %1737 = vmatprep.mubr.bf16.mxu0 0
  %1738 = vmatmul.mubr.bf16.gmra.mxu0 %v1564
  %v1739 = vpop.f32.mrf.mxu0
  %v1740 = vadd.f32 0.0, %v1739
  %v1741 = vpop.f32.mrf.mxu0
  %v1742 = vadd.f32 0.0, %v1741
  %v1743 = vpop.f32.mrf.mxu0
  %v1744 = vadd.f32 0.0, %v1743
  %v1745 = vpop.f32.mrf.mxu0
  %v1746 = vadd.f32 0.0, %v1745
  %1747 = vmatprep.mubr.bf16.mxu0 0
  %1748 = vmatmul.mubr.bf16.gmra.mxu0 %v1565
  %v1749 = vpop.f32.mrf.mxu0
  %v1750 = vadd.f32 0.0, %v1749
  %v1751 = vpop.f32.mrf.mxu0
  %v1752 = vadd.f32 0.0, %v1751
  %v1753 = vpop.f32.mrf.mxu0
  %v1754 = vadd.f32 0.0, %v1753
  %v1755 = vpop.f32.mrf.mxu0
  %v1756 = vadd.f32 0.0, %v1755
  %1757 = vmatprep.mubr.bf16.mxu0 0
  %1758 = vmatmul.mubr.bf16.gmra.mxu0 %v1566
  %v1759 = vpop.f32.mrf.mxu0
  %v1760 = vadd.f32 0.0, %v1759
  %v1761 = vpop.f32.mrf.mxu0
  %v1762 = vadd.f32 0.0, %v1761
  %v1763 = vpop.f32.mrf.mxu0
  %v1764 = vadd.f32 0.0, %v1763
  %v1765 = vpop.f32.mrf.mxu0
  %v1766 = vadd.f32 0.0, %v1765
  %1767 = vdwg.mxu0
  %v1768 = vadd.f32 %v1416, %v1690
  %v1769 = vadd.f32 %v1418, %v1692
  %v1770 = vadd.f32 %v1420, %v1694
  %v1771 = vadd.f32 %v1422, %v1696
  %v1772 = vadd.f32 %v1426, %v1700
  %v1773 = vadd.f32 %v1428, %v1702
  %v1774 = vadd.f32 %v1430, %v1704
  %v1775 = vadd.f32 %v1432, %v1706
  %v1776 = vadd.f32 %v1436, %v1710
  %v1777 = vadd.f32 %v1438, %v1712
  %v1778 = vadd.f32 %v1440, %v1714
  %v1779 = vadd.f32 %v1442, %v1716
  %v1780 = vadd.f32 %v1446, %v1720
  %v1781 = vadd.f32 %v1448, %v1722
  %v1782 = vadd.f32 %v1450, %v1724
  %v1783 = vadd.f32 %v1452, %v1726
  %v1784 = vadd.f32 %v1456, %v1730
  %v1785 = vadd.f32 %v1458, %v1732
  %v1786 = vadd.f32 %v1460, %v1734
  %v1787 = vadd.f32 %v1462, %v1736
  %v1788 = vadd.f32 %v1466, %v1740
  %v1789 = vadd.f32 %v1468, %v1742
  %v1790 = vadd.f32 %v1470, %v1744
  %v1791 = vadd.f32 %v1472, %v1746
  %v1792 = vadd.f32 %v1476, %v1750
  %v1793 = vadd.f32 %v1478, %v1752
  %v1794 = vadd.f32 %v1480, %v1754
  %v1795 = vadd.f32 %v1482, %v1756
  %v1796 = vadd.f32 %v1486, %v1760
  %v1797 = vadd.f32 %v1488, %v1762
  %v1798 = vadd.f32 %v1490, %v1764
  %v1799 = vadd.f32 %v1492, %v1766
  %v1800 = vld [vmem:[#allocation2 + $0x18] sm:$0xf]
  %v1801 = vld [vmem:[#allocation2 + $0x1c] sm:$0xf]
  %v1802 = vld [vmem:[#allocation2 + $0x20] sm:$0xf]
  %v1803 = vld [vmem:[#allocation2 + $0x24] sm:$0xf]
  %v1804 = vld [vmem:[#allocation2 + $0x28] sm:$0xf]
  %v1805 = vld [vmem:[#allocation2 + $0x2c] sm:$0xf]
  %v1806 = vld [vmem:[#allocation2 + $0x30] sm:$0xf]
  %v1807 = vld [vmem:[#allocation2 + $0x34] sm:$0xf]
  %v1808 = vld [vmem:[#allocation2 + $0x38] sm:$0xf]
  %v1809 = vld [vmem:[#allocation2 + $0x3c] sm:$0xf]
  %v1810 = vld [vmem:[#allocation2 + $0x40] sm:$0xf]
  %v1811 = vld [vmem:[#allocation2 + $0x44] sm:$0xf]
  %v1812 = vld [vmem:[#allocation2 + $0x48] sm:$0xf]
  %v1813 = vld [vmem:[#allocation2 + $0x4c] sm:$0xf]
  %v1814 = vld [vmem:[#allocation2 + $0x50] sm:$0xf]
  %v1815 = vld [vmem:[#allocation2 + $0x54] sm:$0xf]
  %s1816 = scalar_lea.vmem %s3, 384
  %v1817 = vld [vmem:[%s1816] sm:$0xff]
  %v1818 = vld [vmem:[%s1816 + $0x8] sm:$0xff]
  %v1819 = vld [vmem:[%s1816 + $0x10] sm:$0xff]
  %v1820 = vld [vmem:[%s1816 + $0x18] sm:$0xff]
  %v1821 = vld [vmem:[%s1816 + $0x20] sm:$0xff]
  %v1822 = vld [vmem:[%s1816 + $0x28] sm:$0xff]
  %v1823 = vld [vmem:[%s1816 + $0x30] sm:$0xff]
  %v1824 = vld [vmem:[%s1816 + $0x38] sm:$0xff]
  %v1825 = vld [vmem:[%s1816 + $0x40] sm:$0xff]
  %v1826 = vld [vmem:[%s1816 + $0x48] sm:$0xff]
  %v1827 = vld [vmem:[%s1816 + $0x50] sm:$0xff]
  %v1828 = vld [vmem:[%s1816 + $0x58] sm:$0xff]
  %v1829 = vld [vmem:[%s1816 + $0x60] sm:$0xff]
  %v1830 = vld [vmem:[%s1816 + $0x68] sm:$0xff]
  %v1831 = vld [vmem:[%s1816 + $0x70] sm:$0xff]
  %v1832 = vld [vmem:[%s1816 + $0x78] sm:$0xff]
  %v1849 = vunpack.c.l.b16 %v1800
  %v1850 = vunpack.c.l.b16 %v1801
  %v1851 = vunpack.c.l.b16 %v1802
  %v1852 = vunpack.c.l.b16 %v1803
  %v1853 = vunpack.c.l.b16 %v1804
  %v1854 = vunpack.c.l.b16 %v1805
  %v1855 = vunpack.c.l.b16 %v1806
  %v1856 = vunpack.c.l.b16 %v1807
  %v1857 = vunpack.c.l.b16 %v1808
  %v1858 = vunpack.c.l.b16 %v1809
  %v1859 = vunpack.c.l.b16 %v1810
  %v1860 = vunpack.c.l.b16 %v1811
  %v1861 = vunpack.c.l.b16 %v1812
  %v1862 = vunpack.c.l.b16 %v1813
  %v1863 = vunpack.c.l.b16 %v1814
  %v1864 = vunpack.c.l.b16 %v1815
  %v1865 = vpack.c.b16 %v1850, %v1849
  %v1866 = vpack.c.b16 %v1852, %v1851
  %v1867 = vpack.c.b16 %v1854, %v1853
  %v1868 = vpack.c.b16 %v1856, %v1855
  %v1869 = vpack.c.b16 %v1858, %v1857
  %v1870 = vpack.c.b16 %v1860, %v1859
  %v1871 = vpack.c.b16 %v1862, %v1861
  %v1872 = vpack.c.b16 %v1864, %v1863
  %v1897 = vunpack.c.l.b16 %v1817
  %v1898 = vunpack.c.h.b16 %v1817
  %v1899 = vunpack.c.l.b16 %v1818
  %v1900 = vunpack.c.h.b16 %v1818
  %v1901 = vunpack.c.l.b16 %v1819
  %v1902 = vunpack.c.h.b16 %v1819
  %v1903 = vunpack.c.l.b16 %v1820
  %v1904 = vunpack.c.h.b16 %v1820
  %v1905 = vunpack.c.l.b16 %v1821
  %v1906 = vunpack.c.h.b16 %v1821
  %v1907 = vunpack.c.l.b16 %v1822
  %v1908 = vunpack.c.h.b16 %v1822
  %v1909 = vunpack.c.l.b16 %v1823
  %v1910 = vunpack.c.h.b16 %v1823
  %v1911 = vunpack.c.l.b16 %v1824
  %v1912 = vunpack.c.h.b16 %v1824
  %v1913 = vunpack.c.l.b16 %v1825
  %v1914 = vunpack.c.h.b16 %v1825
  %v1915 = vunpack.c.l.b16 %v1826
  %v1916 = vunpack.c.h.b16 %v1826
  %v1917 = vunpack.c.l.b16 %v1827
  %v1918 = vunpack.c.h.b16 %v1827
  %v1919 = vunpack.c.l.b16 %v1828
  %v1920 = vunpack.c.h.b16 %v1828
  %v1921 = vunpack.c.l.b16 %v1829
  %v1922 = vunpack.c.h.b16 %v1829
  %v1923 = vunpack.c.l.b16 %v1830
  %v1924 = vunpack.c.h.b16 %v1830
  %v1925 = vunpack.c.l.b16 %v1831
  %v1926 = vunpack.c.h.b16 %v1831
  %v1927 = vunpack.c.l.b16 %v1832
  %v1928 = vunpack.c.h.b16 %v1832
  %v1929 = vpack.c.b16 %v1899, %v1897
  %v1930 = vpack.c.b16 %v1900, %v1898
  %v1931 = vpack.c.b16 %v1903, %v1901
  %v1932 = vpack.c.b16 %v1904, %v1902
  %v1933 = vpack.c.b16 %v1907, %v1905
  %v1934 = vpack.c.b16 %v1908, %v1906
  %v1935 = vpack.c.b16 %v1911, %v1909
  %v1936 = vpack.c.b16 %v1912, %v1910
  %v1937 = vpack.c.b16 %v1915, %v1913
  %v1938 = vpack.c.b16 %v1916, %v1914
  %v1939 = vpack.c.b16 %v1919, %v1917
  %v1940 = vpack.c.b16 %v1920, %v1918
  %v1941 = vpack.c.b16 %v1923, %v1921
  %v1942 = vpack.c.b16 %v1924, %v1922
  %v1943 = vpack.c.b16 %v1927, %v1925
  %v1944 = vpack.c.b16 %v1928, %v1926
  %1961 = vmatprep.subr.bf16.mxu0 %v1944
  %1962 = vmatpush1.bf16.msra.mxu0 %v1943
  %1963 = vmatprep.subr.bf16.mxu0 %v1942
  %1964 = vmatpush1.bf16.msra.mxu0 %v1941
  %1965 = vmatprep.subr.bf16.mxu0 %v1940
  %1966 = vmatpush1.bf16.msra.mxu0 %v1939
  %1967 = vmatprep.subr.bf16.mxu0 %v1938
  %1968 = vmatpush1.bf16.msra.mxu0 %v1937
  %1969 = vmatprep.subr.bf16.mxu0 %v1936
  %1970 = vmatpush1.bf16.msra.mxu0 %v1935
  %1971 = vmatprep.subr.bf16.mxu0 %v1934
  %1972 = vmatpush1.bf16.msra.mxu0 %v1933
  %1973 = vmatprep.subr.bf16.mxu0 %v1932
  %1974 = vmatpush1.bf16.msra.mxu0 %v1931
  %1975 = vmatprep.subr.bf16.mxu0 %v1930
  %1976 = vmatpush1.bf16.msra.mxu0 %v1929
  %1977 = vmatprep.subr.bf16.mxu0 0
  %1978 = vmatpush2.bf16.msra.mxu0 0
  %1979 = vmatprep.subr.bf16.mxu0 0
  %1980 = vmatpush2.bf16.msra.mxu0 0
  %1981 = vmatprep.subr.bf16.mxu0 0
  %1982 = vmatpush2.bf16.msra.mxu0 0
  %1983 = vmatprep.subr.bf16.mxu0 0
  %1984 = vmatpush2.bf16.msra.mxu0 0
  %1985 = vmatprep.subr.bf16.mxu0 0
  %1986 = vmatpush2.bf16.msra.mxu0 0
  %1987 = vmatprep.subr.bf16.mxu0 0
  %1988 = vmatpush2.bf16.msra.mxu0 0
  %1989 = vmatprep.subr.bf16.mxu0 0
  %1990 = vmatpush2.bf16.msra.mxu0 0
  %1991 = vmatprep.subr.bf16.mxu0 0
  %1992 = vmatpush2.bf16.msra.mxu0 0
  %1993 = vmatprep.mubr.bf16.mxu0 0
  %1994 = vmatmul.mubr.bf16.gmra.mxu0 %v1865
  %v1995 = vpop.f32.mrf.mxu0
  %v1996 = vadd.f32 0.0, %v1995
  %v1997 = vpop.f32.mrf.mxu0
  %v1998 = vadd.f32 0.0, %v1997
  %v1999 = vpop.f32.mrf.mxu0
  %v2000 = vadd.f32 0.0, %v1999
  %v2001 = vpop.f32.mrf.mxu0
  %v2002 = vadd.f32 0.0, %v2001
  %2003 = vmatprep.mubr.bf16.mxu0 0
  %2004 = vmatmul.mubr.bf16.gmra.mxu0 %v1866
  %v2005 = vpop.f32.mrf.mxu0
  %v2006 = vadd.f32 0.0, %v2005
  %v2007 = vpop.f32.mrf.mxu0
  %v2008 = vadd.f32 0.0, %v2007
  %v2009 = vpop.f32.mrf.mxu0
  %v2010 = vadd.f32 0.0, %v2009
  %v2011 = vpop.f32.mrf.mxu0
  %v2012 = vadd.f32 0.0, %v2011
  %2013 = vmatprep.mubr.bf16.mxu0 0
  %2014 = vmatmul.mubr.bf16.gmra.mxu0 %v1867
  %v2015 = vpop.f32.mrf.mxu0
  %v2016 = vadd.f32 0.0, %v2015
  %v2017 = vpop.f32.mrf.mxu0
  %v2018 = vadd.f32 0.0, %v2017
  %v2019 = vpop.f32.mrf.mxu0
  %v2020 = vadd.f32 0.0, %v2019
  %v2021 = vpop.f32.mrf.mxu0
  %v2022 = vadd.f32 0.0, %v2021
  %2023 = vmatprep.mubr.bf16.mxu0 0
  %2024 = vmatmul.mubr.bf16.gmra.mxu0 %v1868
  %v2025 = vpop.f32.mrf.mxu0
  %v2026 = vadd.f32 0.0, %v2025
  %v2027 = vpop.f32.mrf.mxu0
  %v2028 = vadd.f32 0.0, %v2027
  %v2029 = vpop.f32.mrf.mxu0
  %v2030 = vadd.f32 0.0, %v2029
  %v2031 = vpop.f32.mrf.mxu0
  %v2032 = vadd.f32 0.0, %v2031
  %2033 = vmatprep.mubr.bf16.mxu0 0
  %2034 = vmatmul.mubr.bf16.gmra.mxu0 %v1869
  %v2035 = vpop.f32.mrf.mxu0
  %v2036 = vadd.f32 0.0, %v2035
  %v2037 = vpop.f32.mrf.mxu0
  %v2038 = vadd.f32 0.0, %v2037
  %v2039 = vpop.f32.mrf.mxu0
  %v2040 = vadd.f32 0.0, %v2039
  %v2041 = vpop.f32.mrf.mxu0
  %v2042 = vadd.f32 0.0, %v2041
  %2043 = vmatprep.mubr.bf16.mxu0 0
  %2044 = vmatmul.mubr.bf16.gmra.mxu0 %v1870
  %v2045 = vpop.f32.mrf.mxu0
  %v2046 = vadd.f32 0.0, %v2045
  %v2047 = vpop.f32.mrf.mxu0
  %v2048 = vadd.f32 0.0, %v2047
  %v2049 = vpop.f32.mrf.mxu0
  %v2050 = vadd.f32 0.0, %v2049
  %v2051 = vpop.f32.mrf.mxu0
  %v2052 = vadd.f32 0.0, %v2051
  %2053 = vmatprep.mubr.bf16.mxu0 0
  %2054 = vmatmul.mubr.bf16.gmra.mxu0 %v1871
  %v2055 = vpop.f32.mrf.mxu0
  %v2056 = vadd.f32 0.0, %v2055
  %v2057 = vpop.f32.mrf.mxu0
  %v2058 = vadd.f32 0.0, %v2057
  %v2059 = vpop.f32.mrf.mxu0
  %v2060 = vadd.f32 0.0, %v2059
  %v2061 = vpop.f32.mrf.mxu0
  %v2062 = vadd.f32 0.0, %v2061
  %2063 = vmatprep.mubr.bf16.mxu0 0
  %2064 = vmatmul.mubr.bf16.gmra.mxu0 %v1872
  %v2065 = vpop.f32.mrf.mxu0
  %v2066 = vadd.f32 0.0, %v2065
  %v2067 = vpop.f32.mrf.mxu0
  %v2068 = vadd.f32 0.0, %v2067
  %v2069 = vpop.f32.mrf.mxu0
  %v2070 = vadd.f32 0.0, %v2069
  %v2071 = vpop.f32.mrf.mxu0
  %v2072 = vadd.f32 0.0, %v2071
  %2073 = vdwg.mxu0
  %v2074 = vadd.f32 %v1768, %v1996
  %v2075 = vadd.f32 %v1769, %v1998
  %v2076 = vadd.f32 %v1770, %v2000
  %v2077 = vadd.f32 %v1771, %v2002
  %v2078 = vadd.f32 %v1772, %v2006
  %v2079 = vadd.f32 %v1773, %v2008
  %v2080 = vadd.f32 %v1774, %v2010
  %v2081 = vadd.f32 %v1775, %v2012
  %v2082 = vadd.f32 %v1776, %v2016
  %v2083 = vadd.f32 %v1777, %v2018
  %v2084 = vadd.f32 %v1778, %v2020
  %v2085 = vadd.f32 %v1779, %v2022
  %v2086 = vadd.f32 %v1780, %v2026
  %v2087 = vadd.f32 %v1781, %v2028
  %v2088 = vadd.f32 %v1782, %v2030
  %v2089 = vadd.f32 %v1783, %v2032
  %v2090 = vadd.f32 %v1784, %v2036
  %v2091 = vadd.f32 %v1785, %v2038
  %v2092 = vadd.f32 %v1786, %v2040
  %v2093 = vadd.f32 %v1787, %v2042
  %v2094 = vadd.f32 %v1788, %v2046
  %v2095 = vadd.f32 %v1789, %v2048
  %v2096 = vadd.f32 %v1790, %v2050
  %v2097 = vadd.f32 %v1791, %v2052
  %v2098 = vadd.f32 %v1792, %v2056
  %v2099 = vadd.f32 %v1793, %v2058
  %v2100 = vadd.f32 %v1794, %v2060
  %v2101 = vadd.f32 %v1795, %v2062
  %v2102 = vadd.f32 %v1796, %v2066
  %v2103 = vadd.f32 %v1797, %v2068
  %v2104 = vadd.f32 %v1798, %v2070
  %v2105 = vadd.f32 %v1799, %v2072
  %v2106 = vld [vmem:[#allocation2 + $0x20] sm:$0xf]
  %v2107 = vld [vmem:[#allocation2 + $0x24] sm:$0xf]
  %v2108 = vld [vmem:[#allocation2 + $0x28] sm:$0xf]
  %v2109 = vld [vmem:[#allocation2 + $0x2c] sm:$0xf]
  %v2110 = vld [vmem:[#allocation2 + $0x30] sm:$0xf]
  %v2111 = vld [vmem:[#allocation2 + $0x34] sm:$0xf]
  %v2112 = vld [vmem:[#allocation2 + $0x38] sm:$0xf]
  %v2113 = vld [vmem:[#allocation2 + $0x3c] sm:$0xf]
  %v2114 = vld [vmem:[#allocation2 + $0x40] sm:$0xf]
  %v2115 = vld [vmem:[#allocation2 + $0x44] sm:$0xf]
  %v2116 = vld [vmem:[#allocation2 + $0x48] sm:$0xf]
  %v2117 = vld [vmem:[#allocation2 + $0x4c] sm:$0xf]
  %v2118 = vld [vmem:[#allocation2 + $0x50] sm:$0xf]
  %v2119 = vld [vmem:[#allocation2 + $0x54] sm:$0xf]
  %v2120 = vld [vmem:[#allocation2 + $0x58] sm:$0xf]
  %v2121 = vld [vmem:[#allocation2 + $0x5c] sm:$0xf]
  %s2122 = scalar_lea.vmem %s3, 512
  %v2123 = vld [vmem:[%s2122] sm:$0xff]
  %v2124 = vld [vmem:[%s2122 + $0x8] sm:$0xff]
  %v2125 = vld [vmem:[%s2122 + $0x10] sm:$0xff]
  %v2126 = vld [vmem:[%s2122 + $0x18] sm:$0xff]
  %v2127 = vld [vmem:[%s2122 + $0x20] sm:$0xff]
  %v2128 = vld [vmem:[%s2122 + $0x28] sm:$0xff]
  %v2129 = vld [vmem:[%s2122 + $0x30] sm:$0xff]
  %v2130 = vld [vmem:[%s2122 + $0x38] sm:$0xff]
  %v2131 = vld [vmem:[%s2122 + $0x40] sm:$0xff]
  %v2132 = vld [vmem:[%s2122 + $0x48] sm:$0xff]
  %v2133 = vld [vmem:[%s2122 + $0x50] sm:$0xff]
  %v2134 = vld [vmem:[%s2122 + $0x58] sm:$0xff]
  %v2135 = vld [vmem:[%s2122 + $0x60] sm:$0xff]
  %v2136 = vld [vmem:[%s2122 + $0x68] sm:$0xff]
  %v2137 = vld [vmem:[%s2122 + $0x70] sm:$0xff]
  %v2138 = vld [vmem:[%s2122 + $0x78] sm:$0xff]
  %v2155 = vunpack.c.l.b16 %v2106
  %v2156 = vunpack.c.l.b16 %v2107
  %v2157 = vunpack.c.l.b16 %v2108
  %v2158 = vunpack.c.l.b16 %v2109
  %v2159 = vunpack.c.l.b16 %v2110
  %v2160 = vunpack.c.l.b16 %v2111
  %v2161 = vunpack.c.l.b16 %v2112
  %v2162 = vunpack.c.l.b16 %v2113
  %v2163 = vunpack.c.l.b16 %v2114
  %v2164 = vunpack.c.l.b16 %v2115
  %v2165 = vunpack.c.l.b16 %v2116
  %v2166 = vunpack.c.l.b16 %v2117
  %v2167 = vunpack.c.l.b16 %v2118
  %v2168 = vunpack.c.l.b16 %v2119
  %v2169 = vunpack.c.l.b16 %v2120
  %v2170 = vunpack.c.l.b16 %v2121
  %v2171 = vpack.c.b16 %v2156, %v2155
  %v2172 = vpack.c.b16 %v2158, %v2157
  %v2173 = vpack.c.b16 %v2160, %v2159
  %v2174 = vpack.c.b16 %v2162, %v2161
  %v2175 = vpack.c.b16 %v2164, %v2163
  %v2176 = vpack.c.b16 %v2166, %v2165
  %v2177 = vpack.c.b16 %v2168, %v2167
  %v2178 = vpack.c.b16 %v2170, %v2169
  %v2203 = vunpack.c.l.b16 %v2123
  %v2204 = vunpack.c.h.b16 %v2123
  %v2205 = vunpack.c.l.b16 %v2124
  %v2206 = vunpack.c.h.b16 %v2124
  %v2207 = vunpack.c.l.b16 %v2125
  %v2208 = vunpack.c.h.b16 %v2125
  %v2209 = vunpack.c.l.b16 %v2126
  %v2210 = vunpack.c.h.b16 %v2126
  %v2211 = vunpack.c.l.b16 %v2127
  %v2212 = vunpack.c.h.b16 %v2127
  %v2213 = vunpack.c.l.b16 %v2128
  %v2214 = vunpack.c.h.b16 %v2128
  %v2215 = vunpack.c.l.b16 %v2129
  %v2216 = vunpack.c.h.b16 %v2129
  %v2217 = vunpack.c.l.b16 %v2130
  %v2218 = vunpack.c.h.b16 %v2130
  %v2219 = vunpack.c.l.b16 %v2131
  %v2220 = vunpack.c.h.b16 %v2131
  %v2221 = vunpack.c.l.b16 %v2132
  %v2222 = vunpack.c.h.b16 %v2132
  %v2223 = vunpack.c.l.b16 %v2133
  %v2224 = vunpack.c.h.b16 %v2133
  %v2225 = vunpack.c.l.b16 %v2134
  %v2226 = vunpack.c.h.b16 %v2134
  %v2227 = vunpack.c.l.b16 %v2135
  %v2228 = vunpack.c.h.b16 %v2135
  %v2229 = vunpack.c.l.b16 %v2136
  %v2230 = vunpack.c.h.b16 %v2136
  %v2231 = vunpack.c.l.b16 %v2137
  %v2232 = vunpack.c.h.b16 %v2137
  %v2233 = vunpack.c.l.b16 %v2138
  %v2234 = vunpack.c.h.b16 %v2138
  %v2235 = vpack.c.b16 %v2205, %v2203
  %v2236 = vpack.c.b16 %v2206, %v2204
  %v2237 = vpack.c.b16 %v2209, %v2207
  %v2238 = vpack.c.b16 %v2210, %v2208
  %v2239 = vpack.c.b16 %v2213, %v2211
  %v2240 = vpack.c.b16 %v2214, %v2212
  %v2241 = vpack.c.b16 %v2217, %v2215
  %v2242 = vpack.c.b16 %v2218, %v2216
  %v2243 = vpack.c.b16 %v2221, %v2219
  %v2244 = vpack.c.b16 %v2222, %v2220
  %v2245 = vpack.c.b16 %v2225, %v2223
  %v2246 = vpack.c.b16 %v2226, %v2224
  %v2247 = vpack.c.b16 %v2229, %v2227
  %v2248 = vpack.c.b16 %v2230, %v2228
  %v2249 = vpack.c.b16 %v2233, %v2231
  %v2250 = vpack.c.b16 %v2234, %v2232
  %2267 = vmatprep.subr.bf16.mxu0 %v2250
  %2268 = vmatpush1.bf16.msra.mxu0 %v2249
  %2269 = vmatprep.subr.bf16.mxu0 %v2248
  %2270 = vmatpush1.bf16.msra.mxu0 %v2247
  %2271 = vmatprep.subr.bf16.mxu0 %v2246
  %2272 = vmatpush1.bf16.msra.mxu0 %v2245
  %2273 = vmatprep.subr.bf16.mxu0 %v2244
  %2274 = vmatpush1.bf16.msra.mxu0 %v2243
  %2275 = vmatprep.subr.bf16.mxu0 %v2242
  %2276 = vmatpush1.bf16.msra.mxu0 %v2241
  %2277 = vmatprep.subr.bf16.mxu0 %v2240
  %2278 = vmatpush1.bf16.msra.mxu0 %v2239
  %2279 = vmatprep.subr.bf16.mxu0 %v2238
  %2280 = vmatpush1.bf16.msra.mxu0 %v2237
  %2281 = vmatprep.subr.bf16.mxu0 %v2236
  %2282 = vmatpush1.bf16.msra.mxu0 %v2235
  %2283 = vmatprep.subr.bf16.mxu0 0
  %2284 = vmatpush2.bf16.msra.mxu0 0
  %2285 = vmatprep.subr.bf16.mxu0 0
  %2286 = vmatpush2.bf16.msra.mxu0 0
  %2287 = vmatprep.subr.bf16.mxu0 0
  %2288 = vmatpush2.bf16.msra.mxu0 0
  %2289 = vmatprep.subr.bf16.mxu0 0
  %2290 = vmatpush2.bf16.msra.mxu0 0
  %2291 = vmatprep.subr.bf16.mxu0 0
  %2292 = vmatpush2.bf16.msra.mxu0 0
  %2293 = vmatprep.subr.bf16.mxu0 0
  %2294 = vmatpush2.bf16.msra.mxu0 0
  %2295 = vmatprep.subr.bf16.mxu0 0
  %2296 = vmatpush2.bf16.msra.mxu0 0
  %2297 = vmatprep.subr.bf16.mxu0 0
  %2298 = vmatpush2.bf16.msra.mxu0 0
  %2299 = vmatprep.mubr.bf16.mxu0 0
  %2300 = vmatmul.mubr.bf16.gmra.mxu0 %v2171
  %v2301 = vpop.f32.mrf.mxu0
  %v2302 = vadd.f32 0.0, %v2301
  %v2303 = vpop.f32.mrf.mxu0
  %v2304 = vadd.f32 0.0, %v2303
  %v2305 = vpop.f32.mrf.mxu0
  %v2306 = vadd.f32 0.0, %v2305
  %v2307 = vpop.f32.mrf.mxu0
  %v2308 = vadd.f32 0.0, %v2307
  %2309 = vmatprep.mubr.bf16.mxu0 0
  %2310 = vmatmul.mubr.bf16.gmra.mxu0 %v2172
  %v2311 = vpop.f32.mrf.mxu0
  %v2312 = vadd.f32 0.0, %v2311
  %v2313 = vpop.f32.mrf.mxu0
  %v2314 = vadd.f32 0.0, %v2313
  %v2315 = vpop.f32.mrf.mxu0
  %v2316 = vadd.f32 0.0, %v2315
  %v2317 = vpop.f32.mrf.mxu0
  %v2318 = vadd.f32 0.0, %v2317
  %2319 = vmatprep.mubr.bf16.mxu0 0
  %2320 = vmatmul.mubr.bf16.gmra.mxu0 %v2173
  %v2321 = vpop.f32.mrf.mxu0
  %v2322 = vadd.f32 0.0, %v2321
  %v2323 = vpop.f32.mrf.mxu0
  %v2324 = vadd.f32 0.0, %v2323
  %v2325 = vpop.f32.mrf.mxu0
  %v2326 = vadd.f32 0.0, %v2325
  %v2327 = vpop.f32.mrf.mxu0
  %v2328 = vadd.f32 0.0, %v2327
  %2329 = vmatprep.mubr.bf16.mxu0 0
  %2330 = vmatmul.mubr.bf16.gmra.mxu0 %v2174
  %v2331 = vpop.f32.mrf.mxu0
  %v2332 = vadd.f32 0.0, %v2331
  %v2333 = vpop.f32.mrf.mxu0
  %v2334 = vadd.f32 0.0, %v2333
  %v2335 = vpop.f32.mrf.mxu0
  %v2336 = vadd.f32 0.0, %v2335
  %v2337 = vpop.f32.mrf.mxu0
  %v2338 = vadd.f32 0.0, %v2337
  %2339 = vmatprep.mubr.bf16.mxu0 0
  %2340 = vmatmul.mubr.bf16.gmra.mxu0 %v2175
  %v2341 = vpop.f32.mrf.mxu0
  %v2342 = vadd.f32 0.0, %v2341
  %v2343 = vpop.f32.mrf.mxu0
  %v2344 = vadd.f32 0.0, %v2343
  %v2345 = vpop.f32.mrf.mxu0
  %v2346 = vadd.f32 0.0, %v2345
  %v2347 = vpop.f32.mrf.mxu0
  %v2348 = vadd.f32 0.0, %v2347
  %2349 = vmatprep.mubr.bf16.mxu0 0
  %2350 = vmatmul.mubr.bf16.gmra.mxu0 %v2176
  %v2351 = vpop.f32.mrf.mxu0
  %v2352 = vadd.f32 0.0, %v2351
  %v2353 = vpop.f32.mrf.mxu0
  %v2354 = vadd.f32 0.0, %v2353
  %v2355 = vpop.f32.mrf.mxu0
  %v2356 = vadd.f32 0.0, %v2355
  %v2357 = vpop.f32.mrf.mxu0
  %v2358 = vadd.f32 0.0, %v2357
  %2359 = vmatprep.mubr.bf16.mxu0 0
  %2360 = vmatmul.mubr.bf16.gmra.mxu0 %v2177
  %v2361 = vpop.f32.mrf.mxu0
  %v2362 = vadd.f32 0.0, %v2361
  %v2363 = vpop.f32.mrf.mxu0
  %v2364 = vadd.f32 0.0, %v2363
  %v2365 = vpop.f32.mrf.mxu0
  %v2366 = vadd.f32 0.0, %v2365
  %v2367 = vpop.f32.mrf.mxu0
  %v2368 = vadd.f32 0.0, %v2367
  %2369 = vmatprep.mubr.bf16.mxu0 0
  %2370 = vmatmul.mubr.bf16.gmra.mxu0 %v2178
  %v2371 = vpop.f32.mrf.mxu0
  %v2372 = vadd.f32 0.0, %v2371
  %v2373 = vpop.f32.mrf.mxu0
  %v2374 = vadd.f32 0.0, %v2373
  %v2375 = vpop.f32.mrf.mxu0
  %v2376 = vadd.f32 0.0, %v2375
  %v2377 = vpop.f32.mrf.mxu0
  %v2378 = vadd.f32 0.0, %v2377
  %2379 = vdwg.mxu0
  %v2380 = vadd.f32 %v2074, %v2302
  %v2381 = vadd.f32 %v2075, %v2304
  %v2382 = vadd.f32 %v2076, %v2306
  %v2383 = vadd.f32 %v2077, %v2308
  %v2384 = vadd.f32 %v2078, %v2312
  %v2385 = vadd.f32 %v2079, %v2314
  %v2386 = vadd.f32 %v2080, %v2316
  %v2387 = vadd.f32 %v2081, %v2318
  %v2388 = vadd.f32 %v2082, %v2322
  %v2389 = vadd.f32 %v2083, %v2324
  %v2390 = vadd.f32 %v2084, %v2326
  %v2391 = vadd.f32 %v2085, %v2328
  %v2392 = vadd.f32 %v2086, %v2332
  %v2393 = vadd.f32 %v2087, %v2334
  %v2394 = vadd.f32 %v2088, %v2336
  %v2395 = vadd.f32 %v2089, %v2338
  %v2396 = vadd.f32 %v2090, %v2342
  %v2397 = vadd.f32 %v2091, %v2344
  %v2398 = vadd.f32 %v2092, %v2346
  %v2399 = vadd.f32 %v2093, %v2348
  %v2400 = vadd.f32 %v2094, %v2352
  %v2401 = vadd.f32 %v2095, %v2354
  %v2402 = vadd.f32 %v2096, %v2356
  %v2403 = vadd.f32 %v2097, %v2358
  %v2404 = vadd.f32 %v2098, %v2362
  %v2405 = vadd.f32 %v2099, %v2364
  %v2406 = vadd.f32 %v2100, %v2366
  %v2407 = vadd.f32 %v2101, %v2368
  %v2408 = vadd.f32 %v2102, %v2372
  %v2409 = vadd.f32 %v2103, %v2374
  %v2410 = vadd.f32 %v2104, %v2376
  %v2411 = vadd.f32 %v2105, %v2378
  %v2412 = vmax.f32 %v2380, %v2381
  %v2413 = vmax.f32 %v2382, %v2383
  %v2414 = vmax.f32 %v2384, %v2385
  %v2415 = vmax.f32 %v2386, %v2387
  %v2416 = vmax.f32 %v2388, %v2389
  %v2417 = vmax.f32 %v2390, %v2391
  %v2418 = vmax.f32 %v2392, %v2393
  %v2419 = vmax.f32 %v2394, %v2395
  %v2420 = vmax.f32 %v2396, %v2397
  %v2421 = vmax.f32 %v2398, %v2399
  %v2422 = vmax.f32 %v2400, %v2401
  %v2423 = vmax.f32 %v2402, %v2403
  %v2424 = vmax.f32 %v2404, %v2405
  %v2425 = vmax.f32 %v2406, %v2407
  %v2426 = vmax.f32 %v2408, %v2409
  %v2427 = vmax.f32 %v2410, %v2411
  %v2428 = vmax.f32 %v2412, %v2414
  %v2429 = vmax.f32 %v2413, %v2415
  %v2430 = vld [vmem:[%s4] sm:$0x1]
  %v2432 = vlaneseq
  %v2433 = vshrl.u32 %v2432, 7
  %v2434 = vsub.s32 0, %v2433
  %v2435 = vrot.slane %v2430, %v2434
  %v2437 = vadd.f32 %v2428, %v2435
  %v2438 = vadd.f32 %v2429, %v2435
  %v2439 = vmax.f32 %v2437, 0.0
  %v2440 = vmax.f32 %v2438, 0.0
  %v2441 = vpack.c.bf16 %v2440, %v2439
  %v2442 = vld [vmem:[%s5] sm:$0xf]
  %v2443 = vld [vmem:[%s5 + $0x4] sm:$0xf]
  %v2444 = vld [vmem:[%s5 + $0x8] sm:$0xf]
  %v2445 = vld [vmem:[%s5 + $0xc] sm:$0xf]
  %v2446 = vld [vmem:[%s5 + $0x10] sm:$0xf]
  %v2447 = vld [vmem:[%s5 + $0x14] sm:$0xf]
  %v2448 = vld [vmem:[%s5 + $0x18] sm:$0xf]
  %v2449 = vld [vmem:[%s5 + $0x1c] sm:$0xf]
  %v2450 = vld [vmem:[%s5 + $0x20] sm:$0xf]
  %v2451 = vld [vmem:[%s5 + $0x24] sm:$0xf]
  %v2452 = vld [vmem:[%s5 + $0x28] sm:$0xf]
  %v2453 = vld [vmem:[%s5 + $0x2c] sm:$0xf]
  %v2454 = vld [vmem:[%s5 + $0x30] sm:$0xf]
  %v2455 = vld [vmem:[%s5 + $0x34] sm:$0xf]
  %v2456 = vld [vmem:[%s5 + $0x38] sm:$0xf]
  %v2457 = vld [vmem:[%s5 + $0x3c] sm:$0xf]
  %v2458 = vmax.f32 %v2416, %v2418
  %v2459 = vmax.f32 %v2417, %v2419
  %v2460 = vadd.f32 %v2458, %v2435
  %v2461 = vadd.f32 %v2459, %v2435
  %v2462 = vmax.f32 %v2460, 0.0
  %v2463 = vmax.f32 %v2461, 0.0
  %v2464 = vpack.c.bf16 %v2463, %v2462
  %s2465 = scalar_lea.vmem %s5, 64
  %v2466 = vld [vmem:[%s2465] sm:$0xf]
  %v2467 = vld [vmem:[%s2465 + $0x4] sm:$0xf]
  %v2468 = vld [vmem:[%s2465 + $0x8] sm:$0xf]
  %v2469 = vld [vmem:[%s2465 + $0xc] sm:$0xf]
  %v2470 = vld [vmem:[%s2465 + $0x10] sm:$0xf]
  %v2471 = vld [vmem:[%s2465 + $0x14] sm:$0xf]
  %v2472 = vld [vmem:[%s2465 + $0x18] sm:$0xf]
  %v2473 = vld [vmem:[%s2465 + $0x1c] sm:$0xf]
  %v2474 = vld [vmem:[%s2465 + $0x20] sm:$0xf]
  %v2475 = vld [vmem:[%s2465 + $0x24] sm:$0xf]
  %v2476 = vld [vmem:[%s2465 + $0x28] sm:$0xf]
  %v2477 = vld [vmem:[%s2465 + $0x2c] sm:$0xf]
  %v2478 = vld [vmem:[%s2465 + $0x30] sm:$0xf]
  %v2479 = vld [vmem:[%s2465 + $0x34] sm:$0xf]
  %v2480 = vld [vmem:[%s2465 + $0x38] sm:$0xf]
  %v2481 = vld [vmem:[%s2465 + $0x3c] sm:$0xf]
  %v2498 = vunpack.c.l.b16 %v2466
  %v2499 = vunpack.c.l.b16 %v2467
  %v2500 = vunpack.c.l.b16 %v2468
  %v2501 = vunpack.c.l.b16 %v2469
  %v2502 = vunpack.c.l.b16 %v2470
  %v2503 = vunpack.c.l.b16 %v2471
  %v2504 = vunpack.c.l.b16 %v2472
  %v2505 = vunpack.c.l.b16 %v2473
  %v2506 = vunpack.c.l.b16 %v2474
  %v2507 = vunpack.c.l.b16 %v2475
  %v2508 = vunpack.c.l.b16 %v2476
  %v2509 = vunpack.c.l.b16 %v2477
  %v2510 = vunpack.c.l.b16 %v2478
  %v2511 = vunpack.c.l.b16 %v2479
  %v2512 = vunpack.c.l.b16 %v2480
  %v2513 = vunpack.c.l.b16 %v2481
  %v2514 = vpack.c.b16 %v2499, %v2498
  %v2515 = vpack.c.b16 %v2501, %v2500
  %v2516 = vpack.c.b16 %v2503, %v2502
  %v2517 = vpack.c.b16 %v2505, %v2504
  %v2518 = vpack.c.b16 %v2507, %v2506
  %v2519 = vpack.c.b16 %v2509, %v2508
  %v2520 = vpack.c.b16 %v2511, %v2510
  %v2521 = vpack.c.b16 %v2513, %v2512
  %2530 = vmatprep.subr.bf16.mxu0 0
  %2531 = vmatpush1.bf16.msra.mxu0 %v2521
  %2532 = vmatprep.subr.bf16.mxu0 0
  %2533 = vmatpush1.bf16.msra.mxu0 %v2520
  %2534 = vmatprep.subr.bf16.mxu0 0
  %2535 = vmatpush1.bf16.msra.mxu0 %v2519
  %2536 = vmatprep.subr.bf16.mxu0 0
  %2537 = vmatpush1.bf16.msra.mxu0 %v2518
  %2538 = vmatprep.subr.bf16.mxu0 0
  %2539 = vmatpush1.bf16.msra.mxu0 %v2517
  %2540 = vmatprep.subr.bf16.mxu0 0
  %2541 = vmatpush1.bf16.msra.mxu0 %v2516
  %2542 = vmatprep.subr.bf16.mxu0 0
  %2543 = vmatpush1.bf16.msra.mxu0 %v2515
  %2544 = vmatprep.subr.bf16.mxu0 0
  %2545 = vmatpush1.bf16.msra.mxu0 %v2514
  %2546 = vmatprep.subr.bf16.mxu0 0
  %2547 = vmatpush2.bf16.msra.mxu0 0
  %2548 = vmatprep.subr.bf16.mxu0 0
  %2549 = vmatpush2.bf16.msra.mxu0 0
  %2550 = vmatprep.subr.bf16.mxu0 0
  %2551 = vmatpush2.bf16.msra.mxu0 0
  %2552 = vmatprep.subr.bf16.mxu0 0
  %2553 = vmatpush2.bf16.msra.mxu0 0
  %2554 = vmatprep.subr.bf16.mxu0 0
  %2555 = vmatpush2.bf16.msra.mxu0 0
  %2556 = vmatprep.subr.bf16.mxu0 0
  %2557 = vmatpush2.bf16.msra.mxu0 0
  %2558 = vmatprep.subr.bf16.mxu0 0
  %2559 = vmatpush2.bf16.msra.mxu0 0
  %2560 = vmatprep.subr.bf16.mxu0 0
  %2561 = vmatpush2.bf16.msra.mxu0 0
  %2562 = vmatprep.mubr.bf16.mxu0 0
  %2563 = vmatmul.mubr.bf16.gmra.mxu0 %v2464
  %v2564 = vpop.f32.mrf.mxu0
  %v2565 = vadd.f32 0.0, %v2564
  %v2566 = vpop.f32.mrf.mxu0
  %v2567 = vpop.f32.mrf.mxu0
  %v2568 = vadd.f32 0.0, %v2567
  %v2569 = vpop.f32.mrf.mxu0
  %2570 = vdwg.mxu0
  %v2587 = vunpack.c.l.b16 %v2442
  %v2588 = vunpack.c.l.b16 %v2443
  %v2589 = vunpack.c.l.b16 %v2444
  %v2590 = vunpack.c.l.b16 %v2445
  %v2591 = vunpack.c.l.b16 %v2446
  %v2592 = vunpack.c.l.b16 %v2447
  %v2593 = vunpack.c.l.b16 %v2448
  %v2594 = vunpack.c.l.b16 %v2449
  %v2595 = vunpack.c.l.b16 %v2450
  %v2596 = vunpack.c.l.b16 %v2451
  %v2597 = vunpack.c.l.b16 %v2452
  %v2598 = vunpack.c.l.b16 %v2453
  %v2599 = vunpack.c.l.b16 %v2454
  %v2600 = vunpack.c.l.b16 %v2455
  %v2601 = vunpack.c.l.b16 %v2456
  %v2602 = vunpack.c.l.b16 %v2457
  %v2603 = vpack.c.b16 %v2588, %v2587
  %v2604 = vpack.c.b16 %v2590, %v2589
  %v2605 = vpack.c.b16 %v2592, %v2591
  %v2606 = vpack.c.b16 %v2594, %v2593
  %v2607 = vpack.c.b16 %v2596, %v2595
  %v2608 = vpack.c.b16 %v2598, %v2597
  %v2609 = vpack.c.b16 %v2600, %v2599
  %v2610 = vpack.c.b16 %v2602, %v2601
  %2619 = vmatprep.subr.bf16.mxu0 0
  %2620 = vmatpush1.bf16.msra.mxu0 %v2610
  %2621 = vmatprep.subr.bf16.mxu0 0
  %2622 = vmatpush1.bf16.msra.mxu0 %v2609
  %2623 = vmatprep.subr.bf16.mxu0 0
  %2624 = vmatpush1.bf16.msra.mxu0 %v2608
  %2625 = vmatprep.subr.bf16.mxu0 0
  %2626 = vmatpush1.bf16.msra.mxu0 %v2607
  %2627 = vmatprep.subr.bf16.mxu0 0
  %2628 = vmatpush1.bf16.msra.mxu0 %v2606
  %2629 = vmatprep.subr.bf16.mxu0 0
  %2630 = vmatpush1.bf16.msra.mxu0 %v2605
  %2631 = vmatprep.subr.bf16.mxu0 0
  %2632 = vmatpush1.bf16.msra.mxu0 %v2604
  %2633 = vmatprep.subr.bf16.mxu0 0
  %2634 = vmatpush1.bf16.msra.mxu0 %v2603
  %2635 = vmatprep.subr.bf16.mxu0 0
  %2636 = vmatpush2.bf16.msra.mxu0 0
  %2637 = vmatprep.subr.bf16.mxu0 0
  %2638 = vmatpush2.bf16.msra.mxu0 0
  %2639 = vmatprep.subr.bf16.mxu0 0
  %2640 = vmatpush2.bf16.msra.mxu0 0
  %2641 = vmatprep.subr.bf16.mxu0 0
  %2642 = vmatpush2.bf16.msra.mxu0 0
  %2643 = vmatprep.subr.bf16.mxu0 0
  %2644 = vmatpush2.bf16.msra.mxu0 0
  %2645 = vmatprep.subr.bf16.mxu0 0
  %2646 = vmatpush2.bf16.msra.mxu0 0
  %2647 = vmatprep.subr.bf16.mxu0 0
  %2648 = vmatpush2.bf16.msra.mxu0 0
  %2649 = vmatprep.subr.bf16.mxu0 0
  %2650 = vmatpush2.bf16.msra.mxu0 0
  %2651 = vmatprep.mubr.bf16.mxu0 0
  %2652 = vmatmul.mubr.bf16.gmra.mxu0 %v2441
  %v2653 = vpop.f32.mrf.mxu0
  %v2654 = vadd.f32 %v2565, %v2653
  %v2655 = vpop.f32.mrf.mxu0
  %v2656 = vpop.f32.mrf.mxu0
  %v2657 = vadd.f32 %v2568, %v2656
  %v2658 = vpop.f32.mrf.mxu0
  %2659 = vdwg.mxu0
  %v2660 = vmax.f32 %v2420, %v2422
  %v2661 = vmax.f32 %v2421, %v2423
  %v2662 = vadd.f32 %v2660, %v2435
  %v2663 = vadd.f32 %v2661, %v2435
  %v2664 = vmax.f32 %v2662, 0.0
  %v2665 = vmax.f32 %v2663, 0.0
  %v2666 = vpack.c.bf16 %v2665, %v2664
  %s2667 = scalar_lea.vmem %s5, 128
  %v2668 = vld [vmem:[%s2667] sm:$0xf]
  %v2669 = vld [vmem:[%s2667 + $0x4] sm:$0xf]
  %v2670 = vld [vmem:[%s2667 + $0x8] sm:$0xf]
  %v2671 = vld [vmem:[%s2667 + $0xc] sm:$0xf]
  %v2672 = vld [vmem:[%s2667 + $0x10] sm:$0xf]
  %v2673 = vld [vmem:[%s2667 + $0x14] sm:$0xf]
  %v2674 = vld [vmem:[%s2667 + $0x18] sm:$0xf]
  %v2675 = vld [vmem:[%s2667 + $0x1c] sm:$0xf]
  %v2676 = vld [vmem:[%s2667 + $0x20] sm:$0xf]
  %v2677 = vld [vmem:[%s2667 + $0x24] sm:$0xf]
  %v2678 = vld [vmem:[%s2667 + $0x28] sm:$0xf]
  %v2679 = vld [vmem:[%s2667 + $0x2c] sm:$0xf]
  %v2680 = vld [vmem:[%s2667 + $0x30] sm:$0xf]
  %v2681 = vld [vmem:[%s2667 + $0x34] sm:$0xf]
  %v2682 = vld [vmem:[%s2667 + $0x38] sm:$0xf]
  %v2683 = vld [vmem:[%s2667 + $0x3c] sm:$0xf]
  %v2700 = vunpack.c.l.b16 %v2668
  %v2701 = vunpack.c.l.b16 %v2669
  %v2702 = vunpack.c.l.b16 %v2670
  %v2703 = vunpack.c.l.b16 %v2671
  %v2704 = vunpack.c.l.b16 %v2672
  %v2705 = vunpack.c.l.b16 %v2673
  %v2706 = vunpack.c.l.b16 %v2674
  %v2707 = vunpack.c.l.b16 %v2675
  %v2708 = vunpack.c.l.b16 %v2676
  %v2709 = vunpack.c.l.b16 %v2677
  %v2710 = vunpack.c.l.b16 %v2678
  %v2711 = vunpack.c.l.b16 %v2679
  %v2712 = vunpack.c.l.b16 %v2680
  %v2713 = vunpack.c.l.b16 %v2681
  %v2714 = vunpack.c.l.b16 %v2682
  %v2715 = vunpack.c.l.b16 %v2683
  %v2716 = vpack.c.b16 %v2701, %v2700
  %v2717 = vpack.c.b16 %v2703, %v2702
  %v2718 = vpack.c.b16 %v2705, %v2704
  %v2719 = vpack.c.b16 %v2707, %v2706
  %v2720 = vpack.c.b16 %v2709, %v2708
  %v2721 = vpack.c.b16 %v2711, %v2710
  %v2722 = vpack.c.b16 %v2713, %v2712
  %v2723 = vpack.c.b16 %v2715, %v2714
  %2732 = vmatprep.subr.bf16.mxu0 0
  %2733 = vmatpush1.bf16.msra.mxu0 %v2723
  %2734 = vmatprep.subr.bf16.mxu0 0
  %2735 = vmatpush1.bf16.msra.mxu0 %v2722
  %2736 = vmatprep.subr.bf16.mxu0 0
  %2737 = vmatpush1.bf16.msra.mxu0 %v2721
  %2738 = vmatprep.subr.bf16.mxu0 0
  %2739 = vmatpush1.bf16.msra.mxu0 %v2720
  %2740 = vmatprep.subr.bf16.mxu0 0
  %2741 = vmatpush1.bf16.msra.mxu0 %v2719
  %2742 = vmatprep.subr.bf16.mxu0 0
  %2743 = vmatpush1.bf16.msra.mxu0 %v2718
  %2744 = vmatprep.subr.bf16.mxu0 0
  %2745 = vmatpush1.bf16.msra.mxu0 %v2717
  %2746 = vmatprep.subr.bf16.mxu0 0
  %2747 = vmatpush1.bf16.msra.mxu0 %v2716
  %2748 = vmatprep.subr.bf16.mxu0 0
  %2749 = vmatpush2.bf16.msra.mxu0 0
  %2750 = vmatprep.subr.bf16.mxu0 0
  %2751 = vmatpush2.bf16.msra.mxu0 0
  %2752 = vmatprep.subr.bf16.mxu0 0
  %2753 = vmatpush2.bf16.msra.mxu0 0
  %2754 = vmatprep.subr.bf16.mxu0 0
  %2755 = vmatpush2.bf16.msra.mxu0 0
  %2756 = vmatprep.subr.bf16.mxu0 0
  %2757 = vmatpush2.bf16.msra.mxu0 0
  %2758 = vmatprep.subr.bf16.mxu0 0
  %2759 = vmatpush2.bf16.msra.mxu0 0
  %2760 = vmatprep.subr.bf16.mxu0 0
  %2761 = vmatpush2.bf16.msra.mxu0 0
  %2762 = vmatprep.subr.bf16.mxu0 0
  %2763 = vmatpush2.bf16.msra.mxu0 0
  %2764 = vmatprep.mubr.bf16.mxu0 0
  %2765 = vmatmul.mubr.bf16.gmra.mxu0 %v2666
  %v2766 = vpop.f32.mrf.mxu0
  %v2767 = vadd.f32 0.0, %v2766
  %v2768 = vpop.f32.mrf.mxu0
  %v2769 = vpop.f32.mrf.mxu0
  %v2770 = vadd.f32 0.0, %v2769
  %v2771 = vpop.f32.mrf.mxu0
  %2772 = vdwg.mxu0
  %v2773 = vadd.f32 %v2654, %v2767
  %v2774 = vadd.f32 %v2657, %v2770
  %v2775 = vmax.f32 %v2424, %v2426
  %v2776 = vmax.f32 %v2425, %v2427
  %v2777 = vadd.f32 %v2775, %v2435
  %v2778 = vadd.f32 %v2776, %v2435
  %v2779 = vmax.f32 %v2777, 0.0
  %v2780 = vmax.f32 %v2778, 0.0
  %v2781 = vpack.c.bf16 %v2780, %v2779
  %s2782 = scalar_lea.vmem %s5, 192
  %v2783 = vld [vmem:[%s2782] sm:$0xf]
  %v2784 = vld [vmem:[%s2782 + $0x4] sm:$0xf]
  %v2785 = vld [vmem:[%s2782 + $0x8] sm:$0xf]
  %v2786 = vld [vmem:[%s2782 + $0xc] sm:$0xf]
  %v2787 = vld [vmem:[%s2782 + $0x10] sm:$0xf]
  %v2788 = vld [vmem:[%s2782 + $0x14] sm:$0xf]
  %v2789 = vld [vmem:[%s2782 + $0x18] sm:$0xf]
  %v2790 = vld [vmem:[%s2782 + $0x1c] sm:$0xf]
  %v2791 = vld [vmem:[%s2782 + $0x20] sm:$0xf]
  %v2792 = vld [vmem:[%s2782 + $0x24] sm:$0xf]
  %v2793 = vld [vmem:[%s2782 + $0x28] sm:$0xf]
  %v2794 = vld [vmem:[%s2782 + $0x2c] sm:$0xf]
  %v2795 = vld [vmem:[%s2782 + $0x30] sm:$0xf]
  %v2796 = vld [vmem:[%s2782 + $0x34] sm:$0xf]
  %v2797 = vld [vmem:[%s2782 + $0x38] sm:$0xf]
  %v2798 = vld [vmem:[%s2782 + $0x3c] sm:$0xf]
  %v2815 = vunpack.c.l.b16 %v2783
  %v2816 = vunpack.c.l.b16 %v2784
  %v2817 = vunpack.c.l.b16 %v2785
  %v2818 = vunpack.c.l.b16 %v2786
  %v2819 = vunpack.c.l.b16 %v2787
  %v2820 = vunpack.c.l.b16 %v2788
  %v2821 = vunpack.c.l.b16 %v2789
  %v2822 = vunpack.c.l.b16 %v2790
  %v2823 = vunpack.c.l.b16 %v2791
  %v2824 = vunpack.c.l.b16 %v2792
  %v2825 = vunpack.c.l.b16 %v2793
  %v2826 = vunpack.c.l.b16 %v2794
  %v2827 = vunpack.c.l.b16 %v2795
  %v2828 = vunpack.c.l.b16 %v2796
  %v2829 = vunpack.c.l.b16 %v2797
  %v2830 = vunpack.c.l.b16 %v2798
  %v2831 = vpack.c.b16 %v2816, %v2815
  %v2832 = vpack.c.b16 %v2818, %v2817
  %v2833 = vpack.c.b16 %v2820, %v2819
  %v2834 = vpack.c.b16 %v2822, %v2821
  %v2835 = vpack.c.b16 %v2824, %v2823
  %v2836 = vpack.c.b16 %v2826, %v2825
  %v2837 = vpack.c.b16 %v2828, %v2827
  %v2838 = vpack.c.b16 %v2830, %v2829
  %2847 = vmatprep.subr.bf16.mxu0 0
  %2848 = vmatpush1.bf16.msra.mxu0 %v2838
  %2849 = vmatprep.subr.bf16.mxu0 0
  %2850 = vmatpush1.bf16.msra.mxu0 %v2837
  %2851 = vmatprep.subr.bf16.mxu0 0
  %2852 = vmatpush1.bf16.msra.mxu0 %v2836
  %2853 = vmatprep.subr.bf16.mxu0 0
  %2854 = vmatpush1.bf16.msra.mxu0 %v2835
  %2855 = vmatprep.subr.bf16.mxu0 0
  %2856 = vmatpush1.bf16.msra.mxu0 %v2834
  %2857 = vmatprep.subr.bf16.mxu0 0
  %2858 = vmatpush1.bf16.msra.mxu0 %v2833
  %2859 = vmatprep.subr.bf16.mxu0 0
  %2860 = vmatpush1.bf16.msra.mxu0 %v2832
  %2861 = vmatprep.subr.bf16.mxu0 0
  %2862 = vmatpush1.bf16.msra.mxu0 %v2831
  %2863 = vmatprep.subr.bf16.mxu0 0
  %2864 = vmatpush2.bf16.msra.mxu0 0
  %2865 = vmatprep.subr.bf16.mxu0 0
  %2866 = vmatpush2.bf16.msra.mxu0 0
  %2867 = vmatprep.subr.bf16.mxu0 0
  %2868 = vmatpush2.bf16.msra.mxu0 0
  %2869 = vmatprep.subr.bf16.mxu0 0
  %2870 = vmatpush2.bf16.msra.mxu0 0
  %2871 = vmatprep.subr.bf16.mxu0 0
  %2872 = vmatpush2.bf16.msra.mxu0 0
  %2873 = vmatprep.subr.bf16.mxu0 0
  %2874 = vmatpush2.bf16.msra.mxu0 0
  %2875 = vmatprep.subr.bf16.mxu0 0
  %2876 = vmatpush2.bf16.msra.mxu0 0
  %2877 = vmatprep.subr.bf16.mxu0 0
  %2878 = vmatpush2.bf16.msra.mxu0 0
  %2879 = vmatprep.mubr.bf16.mxu0 0
  %2880 = vmatmul.mubr.bf16.gmra.mxu0 %v2781
  %v2881 = vpop.f32.mrf.mxu0
  %v2882 = vadd.f32 0.0, %v2881
  %v2883 = vpop.f32.mrf.mxu0
  %v2884 = vpop.f32.mrf.mxu0
  %v2885 = vadd.f32 0.0, %v2884
  %v2886 = vpop.f32.mrf.mxu0
  %2887 = vdwg.mxu0
  %v2888 = vadd.f32 %v2773, %v2882
  %v2889 = vadd.f32 %v2774, %v2885
  %v2890 = vld [vmem:[%s6] sm:$0x1]
  %v2892 = vlaneseq
  %v2893 = vshrl.u32 %v2892, 7
  %v2894 = vsub.s32 0, %v2893
  %v2895 = vrot.slane %v2890, %v2894
  %v2897 = vadd.f32 %v2888, %v2895
  %v2898 = vadd.f32 %v2889, %v2895
  %v2899 = vmax.f32 %v2897, 0.0
  %v2900 = vmax.f32 %v2898, 0.0
  %v2901 = vpack.c.bf16 %v2900, %v2899
  %v2902 = vld [vmem:[%s7] sm:$0xf]
  %v2903 = vld [vmem:[%s7 + $0x4] sm:$0xf]
  %v2904 = vld [vmem:[%s7 + $0x8] sm:$0xf]
  %v2905 = vld [vmem:[%s7 + $0xc] sm:$0xf]
  %v2906 = vld [vmem:[%s7 + $0x10] sm:$0xf]
  %v2907 = vld [vmem:[%s7 + $0x14] sm:$0xf]
  %v2908 = vld [vmem:[%s7 + $0x18] sm:$0x1]
  %v2909 = vld [vmem:[%s8] sm:$0x1]
  %v2911 = vlaneseq
  %v2912 = vshrl.u32 %v2911, 7
  %v2913 = vsub.s32 0, %v2912
  %v2914 = vrot.slane %v2909, %v2913
  %v2923 = vunpack.c.l.b16 %v2902
  %v2924 = vunpack.c.l.b16 %v2903
  %v2925 = vunpack.c.l.b16 %v2904
  %v2926 = vunpack.c.l.b16 %v2905
  %v2927 = vunpack.c.l.b16 %v2906
  %v2928 = vunpack.c.l.b16 %v2907
  %v2929 = vunpack.c.l.b16 %v2908
  %v2930 = vpack.c.b16 %v2924, %v2923
  %v2931 = vpack.c.b16 %v2926, %v2925
  %v2932 = vpack.c.b16 %v2928, %v2927
  %v2933 = vpack.c.b16 %v2929, %v2929
  %vm2937 = vcmask 408576
  %v2939 = vsel %vm2937, %v2901, 0
  %vm2941 = vcmask 1040384
  %v2943 = vsel %vm2941, %v2933, 0
  %2945 = vmatprep.subr.bf16.mxu0 0
  %2946 = vmatpush1.bf16.msra.mxu0 0
  %2947 = vmatprep.subr.bf16.mxu0 0
  %2948 = vmatpush1.bf16.msra.mxu0 0
  %2949 = vmatprep.subr.bf16.mxu0 0
  %2950 = vmatpush1.bf16.msra.mxu0 0
  %2951 = vmatprep.subr.bf16.mxu0 0
  %2952 = vmatpush1.bf16.msra.mxu0 0
  %2953 = vmatprep.subr.bf16.mxu0 0
  %2954 = vmatpush1.bf16.msra.mxu0 %v2943
  %2955 = vmatprep.subr.bf16.mxu0 0
  %2956 = vmatpush1.bf16.msra.mxu0 %v2932
  %2957 = vmatprep.subr.bf16.mxu0 0
  %2958 = vmatpush1.bf16.msra.mxu0 %v2931
  %2959 = vmatprep.subr.bf16.mxu0 0
  %2960 = vmatpush1.bf16.msra.mxu0 %v2930
  %2961 = vmatprep.subr.bf16.mxu0 0
  %2962 = vmatpush2.bf16.msra.mxu0 0
  %2963 = vmatprep.subr.bf16.mxu0 0
  %2964 = vmatpush2.bf16.msra.mxu0 0
  %2965 = vmatprep.subr.bf16.mxu0 0
  %2966 = vmatpush2.bf16.msra.mxu0 0
  %2967 = vmatprep.subr.bf16.mxu0 0
  %2968 = vmatpush2.bf16.msra.mxu0 0
  %2969 = vmatprep.subr.bf16.mxu0 0
  %2970 = vmatpush2.bf16.msra.mxu0 0
  %2971 = vmatprep.subr.bf16.mxu0 0
  %2972 = vmatpush2.bf16.msra.mxu0 0
  %2973 = vmatprep.subr.bf16.mxu0 0
  %2974 = vmatpush2.bf16.msra.mxu0 0
  %2975 = vmatprep.subr.bf16.mxu0 0
  %2976 = vmatpush2.bf16.msra.mxu0 0
  %2977 = vmatprep.mubr.bf16.mxu0 0
  %2978 = vmatmul.mubr.bf16.gmra.mxu0 %v2939
  %v2979 = vpop.f32.mrf.mxu0
  %v2980 = vadd.f32 %v2914, %v2979
  %v2981 = vpop.f32.mrf.mxu0
  %v2982 = vpop.f32.mrf.mxu0
  %v2983 = vadd.f32 %v2914, %v2982
  %v2984 = vpop.f32.mrf.mxu0
  %2985 = vdwg.mxu0
  %vm2986 = vcmask 80896
  %v2987 = vsel %vm2986, %v2980, -inf
  %2988 = vmax.xlane.f32.xlu0 %v2987
  %v2989 = vpop.xlane.xlu0 %2988
  %v2990 = vsel %vm2986, %v2983, -inf
  %2991 = vmax.xlane.f32.xlu0 %v2990
  %v2992 = vpop.xlane.xlu0 %2991
  %v2993 = vsub.f32 %v2980, %v2989
  %v2994 = vsub.f32 %v2983, %v2992
  %v2995 = vmul.f32 %v2993, 1.442695
  %v2996 = vpow.pop %v2995
  %v2997 = vmul.f32 %v2994, 1.442695
  %v2998 = vpow.pop %v2997
  %v2999 = vsel %vm2986, %v2996, 0.0
  %3000 = vadd.xlane.f32.xlu0 %v2999
  %v3001 = vpop.xlane.xlu0 %3000
  %v3002 = vsel %vm2986, %v2998, 0.0
  %3003 = vadd.xlane.f32.xlu0 %v3002
  %v3004 = vpop.xlane.xlu0 %3003
  %v3005 = vlog2.pop %v3001
  %v3006 = vmul.f32 %v3005, 0.6931472
  %v3007 = vlog2.pop %v3004
  %v3008 = vmul.f32 %v3007, 0.6931472
  %v3009 = vsub.f32 %v2993, %v3006
  %v3010 = vsub.f32 %v2994, %v3008
  %3011 = vst.msk [vmem:[%s9] sm:$0xff] %vm2986, %v3009
  %3012 = vst.msk [vmem:[%s9 + $0x8] sm:$0xff] %vm2986, %v3010
  // Predicated region
  $region38: #{net_forward.1} parent=0 // pred_check
    _
  $region39: #{net_forward.1} parent=0 // pred_check_branch
    %3014 = sbr.rel (0) target = $region41
  $region40: #{net_forward.1} parent=0 // pred_region
    _
  $region41: #{net_forward.1} parent=0 // pred_fallthru
    _
  // Predicated region
  $region42: #{net_forward.1} parent=0 // pred_check
    _
  $region43: #{net_forward.1} parent=0 // pred_check_branch
    %3016 = sbr.rel (0) target = $region45
  $region44: #{net_forward.1} parent=0 // pred_region
    _
  $region45: #{net_forward.1} parent=0 // pred_fallthru
    _

</llo_original>
